<compile_context>
chip_gen: v7x
topology: tpu7x:2x2x1
jax: 0.10.0
libtpu: 0.0.40
codegen_flags: <defaults>
</compile_context>

<pallas_src>
import functools

import jax
import jax.numpy as jnp
from jax import lax
from jax.experimental import pallas as pl
from jax.experimental.pallas import tpu as pltpu

# ----------------------- configuration (small shapes) -----------------------
N_HEAD = 2
D_MODEL = 32
D_HEAD = 16
QLEN = 8
MLEN = 8
BSZ = 2
KLEN = QLEN + MLEN
RLEN = KLEN
HD = N_HEAD * D_HEAD
SCALE = 1.0 / (D_HEAD ** 0.5)
PRE_LNORM = False
NEG_INF = -1e30   # masked_fill(-inf): exp() underflows to exactly 0 either way
LN_EPS = 1e-5
# TODO(synk): dropout / dropatt are identity (p=0 / eval mode); no RNG applied.

BF16 = jnp.bfloat16


# --------------------------- in-kernel helpers ------------------------------
def _layernorm(x, g, b):
    mu = jnp.mean(x, axis=-1, keepdims=True)
    var = jnp.mean(jnp.square(x - mu), axis=-1, keepdims=True)
    return (x - mu) * lax.rsqrt(var + LN_EPS) * g + b


def _rel_shift(x, row):
    """out[i, j] = x[i, j + QLEN-1-i] on the causally valid region.

    Positions with j > i + MLEN receive zeros here; they are overwritten with
    NEG_INF by the causal mask before softmax (requires RLEN == KLEN ==
    QLEN + MLEN, asserted in the wrapper).
    TODO(synk): replace with strided pltpu.roll at production shapes."""
    q, k = x.shape
    y = jnp.concatenate([x, jnp.zeros((q, q - 1), x.dtype)], axis=1)  # (q, k+q-1)
    out = jnp.zeros_like(x)
    for i in range(q):                                   # q small & static
        s = q - 1 - i
        out = jnp.where(row == i, y[:, s:s + k], out)
    return out


# ------------------------------ fused kernel --------------------------------
def _fused_kernel(w_ref, mems_ref, r_ref, w_qkv_ref, w_r_ref, w_o_ref,
                  rwb_ref, rrb_ref, ln_g_ref, ln_b_ref, o_ref):
    g = ln_g_ref[...]                                    # (1, D_MODEL) f32
    beta = ln_b_ref[...]
    rwb = rwb_ref[...]                                   # (1, HD)
    rrb = rrb_ref[...]

    # Weights cast to bf16 ONCE (MXU operands); accumulate in f32.
    w_qkv = w_qkv_ref[...].astype(BF16)                  # (D_MODEL, 3*HD)
    w_o = w_o_ref[...].astype(BF16)                      # (HD, D_MODEL)

    # r_net projection, shared across batch.
    r_k = jnp.dot(r_ref[...].astype(BF16), w_r_ref[...].astype(BF16),
                  preferred_element_type=jnp.float32)    # (RLEN, HD) f32
    r_k_bf = r_k.astype(BF16)

    # Causal mask & row iota built in-kernel (shared by every batch / head):
    # key j is masked for query i iff j > i + MLEN.
    qi = lax.broadcasted_iota(jnp.int32, (QLEN, KLEN), 0)
    kj = lax.broadcasted_iota(jnp.int32, (QLEN, KLEN), 1)
    masked = kj > qi + MLEN

    for b in range(BSZ):                                 # single grid step; static unroll
        c0 = b * D_MODEL
        w_b = w_ref[:, c0:c0 + D_MODEL]                  # (QLEN, D_MODEL)  residual stream
        m_b = mems_ref[:, c0:c0 + D_MODEL]               # (MLEN, D_MODEL)
        cat = jnp.concatenate([m_b, w_b], axis=0)        # (KLEN, D_MODEL)  in-kernel concat

        attn_in = _layernorm(cat, g, beta) if PRE_LNORM else cat

        # qkv_net projection (MXU, bf16 operands, f32 accumulation)
        heads = jnp.dot(attn_in.astype(BF16), w_qkv,
                        preferred_element_type=jnp.float32)   # (KLEN, 3*HD)
        q = heads[MLEN:, 0:HD]                                # (QLEN, HD) f32
        k_bf = heads[:, HD:2 * HD].astype(BF16)               # (KLEN, HD)
        v_bf = heads[:, 2 * HD:3 * HD].astype(BF16)           # (KLEN, HD)

        # SCALE folded once into the biased queries (f32), then cast for MXU.
        rw_q = ((q + rwb) * SCALE).astype(BF16)               # (QLEN, HD)
        rr_q = ((q + rrb) * SCALE).astype(BF16)

        head_outs = []
        for h in range(N_HEAD):                               # static unroll
            s0 = h * D_HEAD
            # content-content and content-position scores (MXU)
            ac = lax.dot_general(rw_q[:, s0:s0 + D_HEAD], k_bf[:, s0:s0 + D_HEAD],
                                 (((1,), (1,)), ((), ())),
                                 preferred_element_type=jnp.float32)   # (Q, KLEN)
            bd = lax.dot_general(rr_q[:, s0:s0 + D_HEAD], r_k_bf[:, s0:s0 + D_HEAD],
                                 (((1,), (1,)), ((), ())),
                                 preferred_element_type=jnp.float32)   # (Q, RLEN)
            bd = _rel_shift(bd, qi)

            score = jnp.where(masked, NEG_INF, ac + bd)       # f32

            # softmax over keys (f32; EUP reciprocal)
            mx = jnp.max(score, axis=-1, keepdims=True)
            p = jnp.exp(score - mx)
            denom = jnp.sum(p, axis=-1, keepdims=True)
            prob = p * pl.reciprocal(denom, approx=True)

            head_outs.append(jnp.dot(prob.astype(BF16), v_bf[:, s0:s0 + D_HEAD],
                                     preferred_element_type=jnp.float32))  # (Q, D_HEAD)

        attn_vec = jnp.concatenate(head_outs, axis=-1)        # (QLEN, HD) f32
        attn_out = jnp.dot(attn_vec.astype(BF16), w_o,
                           preferred_element_type=jnp.float32)  # (QLEN, D_MODEL)

        resid = w_b + attn_out
        out_b = resid if PRE_LNORM else _layernorm(resid, g, beta)
        o_ref[:, c0:c0 + D_MODEL] = out_b.astype(o_ref.dtype)


# ------------------------------ full forward --------------------------------
def rel_multi_head_attn_forward(params, w, r, mems):
    qlen, bsz, d_model = w.shape
    mlen = mems.shape[0]
    klen = mlen + qlen
    rlen = r.shape[0]
    # rel-shift zero-fill entries are only safe when they coincide exactly
    # with the causally masked positions:
    assert rlen == klen == qlen + mlen
    assert (qlen, bsz, d_model, mlen) == (QLEN, BSZ, D_MODEL, MLEN)

    # FREE contiguous reshapes only (no transpose / concat copies in HBM).
    w2 = w.reshape(qlen, bsz * d_model)
    mems2 = mems.reshape(mlen, bsz * d_model)

    vmem = pl.BlockSpec(memory_space=pltpu.MemorySpace.VMEM)  # whole-array VMEM blocks
    out2 = pl.pallas_call(
        _fused_kernel,
        out_shape=jax.ShapeDtypeStruct((qlen, bsz * d_model), w.dtype),
        in_specs=[vmem] * 10,
        out_specs=vmem,
    )(w2, mems2, r,
      params["w_qkv"], params["w_r"], params["w_o"],
      params["r_w_bias"].reshape(1, HD), params["r_r_bias"].reshape(1, HD),
      params["ln_g"].reshape(1, d_model), params["ln_b"].reshape(1, d_model))

    return out2.reshape(qlen, bsz, d_model)                   # free reshape


# ----------------------- plain-JAX reference (check) ------------------------
def _rel_shift_ref(x):
    q, k = x.shape[0], x.shape[1]
    zero_pad = jnp.zeros((q, 1) + x.shape[2:], x.dtype)
    x_padded = jnp.concatenate([zero_pad, x], axis=1)
    x_padded = x_padded.reshape((k + 1, q) + x.shape[2:])
    return x_padded[1:].reshape(x.shape)


def reference_forward(params, w, r, mems):
    qlen, bsz, _ = w.shape
    mlen = mems.shape[0]
    klen = mlen + qlen
    rlen = r.shape[0]
    cat = jnp.concatenate([mems, w], axis=0)
    w_heads = cat @ params["w_qkv"]
    r_head_k = (r @ params["w_r"]).reshape(rlen, N_HEAD, D_HEAD)
    w_head_q, w_head_k, w_head_v = jnp.split(w_heads, 3, axis=-1)
    w_head_q = w_head_q[-qlen:].reshape(qlen, bsz, N_HEAD, D_HEAD)
    w_head_k = w_head_k.reshape(klen, bsz, N_HEAD, D_HEAD)
    w_head_v = w_head_v.reshape(klen, bsz, N_HEAD, D_HEAD)
    rw_head_q = w_head_q + params["r_w_bias"]
    rr_head_q = w_head_q + params["r_r_bias"]
    AC = jnp.einsum("ibnd,jbnd->ijbn", rw_head_q, w_head_k)
    BD = _rel_shift_ref(jnp.einsum("ibnd,jnd->ijbn", rr_head_q, r_head_k))
    attn_score = (AC + BD) * SCALE
    mask = (jnp.arange(klen)[None, :] > jnp.arange(qlen)[:, None] + mlen)
    attn_score = jnp.where(mask[:, :, None, None], NEG_INF, attn_score)
    attn_prob = jax.nn.softmax(attn_score, axis=1)
    attn_vec = jnp.einsum("ijbn,jbnd->ibnd", attn_prob, w_head_v)
    attn_out = attn_vec.reshape(qlen, bsz, N_HEAD * D_HEAD) @ params["w_o"]
    out = w + attn_out
    mu = out.mean(-1, keepdims=True)
    var = ((out - mu) ** 2).mean(-1, keepdims=True)
    return (out - mu) / jnp.sqrt(var + LN_EPS) * params["ln_g"] + params["ln_b"]


# ---------------------------------- main -------------------------------------
if __name__ == "__main__":
    key = jax.random.PRNGKey(0)
    ks = jax.random.split(key, 9)
    params = {
        "w_qkv": 0.1 * jax.random.normal(ks[0], (D_MODEL, 3 * HD), jnp.float32),
        # TODO(synk): r_net / r_w_bias / r_r_bias live in the sub-class of
        # RelMultiHeadAttn; synthesized deterministically here.
        "w_r": 0.1 * jax.random.normal(ks[1], (D_MODEL, HD), jnp.float32),
        "w_o": 0.1 * jax.random.normal(ks[2], (HD, D_MODEL), jnp.float32),
        "r_w_bias": 0.1 * jax.random.normal(ks[3], (N_HEAD, D_HEAD), jnp.float32),
        "r_r_bias": 0.1 * jax.random.normal(ks[4], (N_HEAD, D_HEAD), jnp.float32),
        "ln_g": jnp.ones((D_MODEL,), jnp.float32),
        "ln_b": jnp.zeros((D_MODEL,), jnp.float32),
    }
    w = jax.random.normal(ks[5], (QLEN, BSZ, D_MODEL), jnp.float32)
    r = jax.random.normal(ks[6], (RLEN, D_MODEL), jnp.float32)
    mems = jax.random.normal(ks[7], (MLEN, BSZ, D_MODEL), jnp.float32)

    fwd = jax.jit(functools.partial(rel_multi_head_attn_forward, params))
    out = jax.block_until_ready(fwd(w, r, mems))

    ref = reference_forward(params, w, r, mems)
    assert out.shape == (QLEN, BSZ, D_MODEL)
    assert bool(jnp.all(jnp.isfinite(out)))
    # Tolerance covers bf16 MXU operands + approx EUP reciprocal vs f32 reference;
    # any structural bug (mask / rel-shift / bias / scale) produces O(0.1-1) errors.
    if not jnp.allclose(out, ref, rtol=3e-2, atol=3e-2):
        raise AssertionError("Pallas output mismatches reference")
    print("KERNEL_OK")
</pallas_src>

<mosaic_0001>
module attributes {stable_mosaic.version = 11 : i64} {
  func.func @_fused_kernel(%arg0: memref<8x64xf32, #tpu.memory_space<vmem>>, %arg1: memref<8x64xf32, #tpu.memory_space<vmem>>, %arg2: memref<16x32xf32, #tpu.memory_space<vmem>>, %arg3: memref<32x96xf32, #tpu.memory_space<vmem>>, %arg4: memref<32x32xf32, #tpu.memory_space<vmem>>, %arg5: memref<32x32xf32, #tpu.memory_space<vmem>>, %arg6: memref<1x32xf32, #tpu.memory_space<vmem>>, %arg7: memref<1x32xf32, #tpu.memory_space<vmem>>, %arg8: memref<1x32xf32, #tpu.memory_space<vmem>>, %arg9: memref<1x32xf32, #tpu.memory_space<vmem>>, %arg10: memref<8x64xf32, #tpu.memory_space<vmem>>) attributes {dimension_semantics = [], scalar_prefetch = 0 : i64, scratch_operands = 0 : i64, tpu.core_type = #tpu.core_type<tc>} {
    %c0 = arith.constant 0 : index
    %c0_0 = arith.constant 0 : index
    %0 = vector.load %arg8[%c0, %c0_0] : memref<1x32xf32, #tpu.memory_space<vmem>>, vector<1x32xf32>
    %c0_1 = arith.constant 0 : index
    %c0_2 = arith.constant 0 : index
    %1 = vector.load %arg9[%c0_1, %c0_2] : memref<1x32xf32, #tpu.memory_space<vmem>>, vector<1x32xf32>
    %c0_3 = arith.constant 0 : index
    %c0_4 = arith.constant 0 : index
    %2 = vector.load %arg6[%c0_3, %c0_4] : memref<1x32xf32, #tpu.memory_space<vmem>>, vector<1x32xf32>
    %c0_5 = arith.constant 0 : index
    %c0_6 = arith.constant 0 : index
    %3 = vector.load %arg7[%c0_5, %c0_6] : memref<1x32xf32, #tpu.memory_space<vmem>>, vector<1x32xf32>
    %c0_7 = arith.constant 0 : index
    %c0_8 = arith.constant 0 : index
    %4 = vector.load %arg3[%c0_7, %c0_8] : memref<32x96xf32, #tpu.memory_space<vmem>>, vector<32x96xf32>
    %5 = arith.truncf %4 : vector<32x96xf32> to vector<32x96xbf16>
    %c0_9 = arith.constant 0 : index
    %c0_10 = arith.constant 0 : index
    %6 = vector.load %arg5[%c0_9, %c0_10] : memref<32x32xf32, #tpu.memory_space<vmem>>, vector<32x32xf32>
    %7 = arith.truncf %6 : vector<32x32xf32> to vector<32x32xbf16>
    %c0_11 = arith.constant 0 : index
    %c0_12 = arith.constant 0 : index
    %8 = vector.load %arg2[%c0_11, %c0_12] : memref<16x32xf32, #tpu.memory_space<vmem>>, vector<16x32xf32>
    %9 = arith.truncf %8 : vector<16x32xf32> to vector<16x32xbf16>
    %c0_13 = arith.constant 0 : index
    %c0_14 = arith.constant 0 : index
    %10 = vector.load %arg4[%c0_13, %c0_14] : memref<32x32xf32, #tpu.memory_space<vmem>>, vector<32x32xf32>
    %11 = arith.truncf %10 : vector<32x32xf32> to vector<32x32xbf16>
    %cst = arith.constant dense<0.000000e+00> : vector<16x32xf32>
    %12 = tpu.matmul %9, %11, %cst {dimension_numbers = #tpu.dot_dimension_numbers<[1], [0], [0], [1], [0, 0, 1, 1], [], []>} : vector<16x32xbf16>, vector<32x32xbf16>, vector<16x32xf32> -> vector<16x32xf32>
    %13 = arith.truncf %12 : vector<16x32xf32> to vector<16x32xbf16>
    %14 = tpu.iota {dimensions = array<i32: 0>} : vector<8x16xi32>
    %15 = tpu.iota {dimensions = array<i32: 1>} : vector<8x16xi32>
    %c8_i32 = arith.constant 8 : i32
    %16 = vector.broadcast %c8_i32 : i32 to vector<8x16xi32>
    %17 = arith.addi %14, %16 : vector<8x16xi32>
    %18 = arith.cmpi sgt, %15, %17 : vector<8x16xi32>
    %c0_15 = arith.constant 0 : index
    %c0_16 = arith.constant 0 : index
    %19 = vector.load %arg0[%c0_15, %c0_16] : memref<8x64xf32, #tpu.memory_space<vmem>>, vector<8x32xf32>
    %c0_17 = arith.constant 0 : index
    %c0_18 = arith.constant 0 : index
    %20 = vector.load %arg1[%c0_17, %c0_18] : memref<8x64xf32, #tpu.memory_space<vmem>>, vector<8x32xf32>
    %21 = tpu.concatenate %20, %19 in 0 : vector<8x32xf32>, vector<8x32xf32> -> vector<16x32xf32>
    %22 = arith.truncf %21 : vector<16x32xf32> to vector<16x32xbf16>
    %cst_19 = arith.constant dense<0.000000e+00> : vector<16x96xf32>
    %23 = tpu.matmul %22, %5, %cst_19 {dimension_numbers = #tpu.dot_dimension_numbers<[1], [0], [0], [1], [0, 0, 1, 1], [], []>} : vector<16x32xbf16>, vector<32x96xbf16>, vector<16x96xf32> -> vector<16x96xf32>
    %24 = vector.extract_strided_slice %23 {offsets = [8, 0], sizes = [8, 32], strides = [1, 1]} : vector<16x96xf32> to vector<8x32xf32>
    %25 = vector.extract_strided_slice %23 {offsets = [0, 32], sizes = [16, 32], strides = [1, 1]} : vector<16x96xf32> to vector<16x32xf32>
    %26 = arith.truncf %25 : vector<16x32xf32> to vector<16x32xbf16>
    %27 = vector.extract_strided_slice %23 {offsets = [0, 64], sizes = [16, 32], strides = [1, 1]} : vector<16x96xf32> to vector<16x32xf32>
    %28 = arith.truncf %27 : vector<16x32xf32> to vector<16x32xbf16>
    %29 = vector.broadcast %2 : vector<1x32xf32> to vector<8x32xf32>
    %30 = arith.addf %24, %29 : vector<8x32xf32>
    %cst_20 = arith.constant 2.500000e-01 : f32
    %31 = vector.broadcast %cst_20 : f32 to vector<8x32xf32>
    %32 = arith.mulf %30, %31 : vector<8x32xf32>
    %33 = arith.truncf %32 : vector<8x32xf32> to vector<8x32xbf16>
    %34 = vector.broadcast %3 : vector<1x32xf32> to vector<8x32xf32>
    %35 = arith.addf %24, %34 : vector<8x32xf32>
    %cst_21 = arith.constant 2.500000e-01 : f32
    %36 = vector.broadcast %cst_21 : f32 to vector<8x32xf32>
    %37 = arith.mulf %35, %36 : vector<8x32xf32>
    %38 = arith.truncf %37 : vector<8x32xf32> to vector<8x32xbf16>
    %39 = vector.extract_strided_slice %33 {offsets = [0, 0], sizes = [8, 16], strides = [1, 1]} : vector<8x32xbf16> to vector<8x16xbf16>
    %40 = vector.extract_strided_slice %26 {offsets = [0, 0], sizes = [16, 16], strides = [1, 1]} : vector<16x32xbf16> to vector<16x16xbf16>
    %cst_22 = arith.constant dense<0.000000e+00> : vector<8x16xf32>
    %41 = tpu.matmul %39, %40, %cst_22 {dimension_numbers = #tpu.dot_dimension_numbers<[1], [1], [0], [0], [0, 0, 1, 0], [], []>} : vector<8x16xbf16>, vector<16x16xbf16>, vector<8x16xf32> -> vector<8x16xf32>
    %42 = vector.extract_strided_slice %38 {offsets = [0, 0], sizes = [8, 16], strides = [1, 1]} : vector<8x32xbf16> to vector<8x16xbf16>
    %43 = vector.extract_strided_slice %13 {offsets = [0, 0], sizes = [16, 16], strides = [1, 1]} : vector<16x32xbf16> to vector<16x16xbf16>
    %cst_23 = arith.constant dense<0.000000e+00> : vector<8x16xf32>
    %44 = tpu.matmul %42, %43, %cst_23 {dimension_numbers = #tpu.dot_dimension_numbers<[1], [1], [0], [0], [0, 0, 1, 0], [], []>} : vector<8x16xbf16>, vector<16x16xbf16>, vector<8x16xf32> -> vector<8x16xf32>
    %cst_24 = arith.constant 0.000000e+00 : f32
    %45 = vector.broadcast %cst_24 : f32 to vector<8x7xf32>
    %46 = tpu.concatenate %44, %45 in 1 : vector<8x16xf32>, vector<8x7xf32> -> vector<8x23xf32>
    %cst_25 = arith.constant 0.000000e+00 : f32
    %47 = vector.broadcast %cst_25 : f32 to vector<8x16xf32>
    %c0_i32 = arith.constant 0 : i32
    %48 = vector.broadcast %c0_i32 : i32 to vector<8x16xi32>
    %49 = arith.cmpi eq, %14, %48 : vector<8x16xi32>
    %50 = vector.extract_strided_slice %46 {offsets = [0, 7], sizes = [8, 16], strides = [1, 1]} : vector<8x23xf32> to vector<8x16xf32>
    %51 = arith.select %49, %50, %47 : vector<8x16xi1>, vector<8x16xf32>
    %c1_i32 = arith.constant 1 : i32
    %52 = vector.broadcast %c1_i32 : i32 to vector<8x16xi32>
    %53 = arith.cmpi eq, %14, %52 : vector<8x16xi32>
    %54 = vector.extract_strided_slice %46 {offsets = [0, 6], sizes = [8, 16], strides = [1, 1]} : vector<8x23xf32> to vector<8x16xf32>
    %55 = arith.select %53, %54, %51 : vector<8x16xi1>, vector<8x16xf32>
    %c2_i32 = arith.constant 2 : i32
    %56 = vector.broadcast %c2_i32 : i32 to vector<8x16xi32>
    %57 = arith.cmpi eq, %14, %56 : vector<8x16xi32>
    %58 = vector.extract_strided_slice %46 {offsets = [0, 5], sizes = [8, 16], strides = [1, 1]} : vector<8x23xf32> to vector<8x16xf32>
    %59 = arith.select %57, %58, %55 : vector<8x16xi1>, vector<8x16xf32>
    %c3_i32 = arith.constant 3 : i32
    %60 = vector.broadcast %c3_i32 : i32 to vector<8x16xi32>
    %61 = arith.cmpi eq, %14, %60 : vector<8x16xi32>
    %62 = vector.extract_strided_slice %46 {offsets = [0, 4], sizes = [8, 16], strides = [1, 1]} : vector<8x23xf32> to vector<8x16xf32>
    %63 = arith.select %61, %62, %59 : vector<8x16xi1>, vector<8x16xf32>
    %c4_i32 = arith.constant 4 : i32
    %64 = vector.broadcast %c4_i32 : i32 to vector<8x16xi32>
    %65 = arith.cmpi eq, %14, %64 : vector<8x16xi32>
    %66 = vector.extract_strided_slice %46 {offsets = [0, 3], sizes = [8, 16], strides = [1, 1]} : vector<8x23xf32> to vector<8x16xf32>
    %67 = arith.select %65, %66, %63 : vector<8x16xi1>, vector<8x16xf32>
    %c5_i32 = arith.constant 5 : i32
    %68 = vector.broadcast %c5_i32 : i32 to vector<8x16xi32>
    %69 = arith.cmpi eq, %14, %68 : vector<8x16xi32>
    %70 = vector.extract_strided_slice %46 {offsets = [0, 2], sizes = [8, 16], strides = [1, 1]} : vector<8x23xf32> to vector<8x16xf32>
    %71 = arith.select %69, %70, %67 : vector<8x16xi1>, vector<8x16xf32>
    %c6_i32 = arith.constant 6 : i32
    %72 = vector.broadcast %c6_i32 : i32 to vector<8x16xi32>
    %73 = arith.cmpi eq, %14, %72 : vector<8x16xi32>
    %74 = vector.extract_strided_slice %46 {offsets = [0, 1], sizes = [8, 16], strides = [1, 1]} : vector<8x23xf32> to vector<8x16xf32>
    %75 = arith.select %73, %74, %71 : vector<8x16xi1>, vector<8x16xf32>
    %c7_i32 = arith.constant 7 : i32
    %76 = vector.broadcast %c7_i32 : i32 to vector<8x16xi32>
    %77 = arith.cmpi eq, %14, %76 : vector<8x16xi32>
    %78 = vector.extract_strided_slice %46 {offsets = [0, 0], sizes = [8, 16], strides = [1, 1]} : vector<8x23xf32> to vector<8x16xf32>
    %79 = arith.select %77, %78, %75 : vector<8x16xi1>, vector<8x16xf32>
    %80 = arith.addf %41, %79 : vector<8x16xf32>
    %cst_26 = arith.constant -1.000000e+30 : f32
    %81 = vector.broadcast %cst_26 : f32 to vector<8x16xf32>
    %82 = arith.select %18, %81, %80 : vector<8x16xi1>, vector<8x16xf32>
    %cst_27 = arith.constant dense<0xFF800000> : vector<8xf32>
    %83 = vector.multi_reduction <maximumf>, %82, %cst_27 [1] : vector<8x16xf32> to vector<8xf32>
    %84 = vector.shape_cast %83 : vector<8xf32> to vector<8x1xf32>
    %85 = vector.broadcast %84 : vector<8x1xf32> to vector<8x16xf32>
    %86 = arith.subf %82, %85 : vector<8x16xf32>
    %87 = math.exp %86 : vector<8x16xf32>
    %cst_28 = arith.constant dense<0.000000e+00> : vector<8xf32>
    %88 = vector.multi_reduction <add>, %87, %cst_28 [1] : vector<8x16xf32> to vector<8xf32>
    %89 = vector.shape_cast %88 : vector<8xf32> to vector<8x1xf32>
    %90 = tpu.reciprocal %89 {approx = true} : vector<8x1xf32> -> vector<8x1xf32>
    %91 = vector.broadcast %90 : vector<8x1xf32> to vector<8x16xf32>
    %92 = arith.mulf %87, %91 : vector<8x16xf32>
    %93 = arith.truncf %92 : vector<8x16xf32> to vector<8x16xbf16>
    %94 = vector.extract_strided_slice %28 {offsets = [0, 0], sizes = [16, 16], strides = [1, 1]} : vector<16x32xbf16> to vector<16x16xbf16>
    %cst_29 = arith.constant dense<0.000000e+00> : vector<8x16xf32>
    %95 = tpu.matmul %93, %94, %cst_29 {dimension_numbers = #tpu.dot_dimension_numbers<[1], [0], [0], [1], [0, 0, 1, 1], [], []>} : vector<8x16xbf16>, vector<16x16xbf16>, vector<8x16xf32> -> vector<8x16xf32>
    %96 = vector.extract_strided_slice %33 {offsets = [0, 16], sizes = [8, 16], strides = [1, 1]} : vector<8x32xbf16> to vector<8x16xbf16>
    %97 = vector.extract_strided_slice %26 {offsets = [0, 16], sizes = [16, 16], strides = [1, 1]} : vector<16x32xbf16> to vector<16x16xbf16>
    %cst_30 = arith.constant dense<0.000000e+00> : vector<8x16xf32>
    %98 = tpu.matmul %96, %97, %cst_30 {dimension_numbers = #tpu.dot_dimension_numbers<[1], [1], [0], [0], [0, 0, 1, 0], [], []>} : vector<8x16xbf16>, vector<16x16xbf16>, vector<8x16xf32> -> vector<8x16xf32>
    %99 = vector.extract_strided_slice %38 {offsets = [0, 16], sizes = [8, 16], strides = [1, 1]} : vector<8x32xbf16> to vector<8x16xbf16>
    %100 = vector.extract_strided_slice %13 {offsets = [0, 16], sizes = [16, 16], strides = [1, 1]} : vector<16x32xbf16> to vector<16x16xbf16>
    %cst_31 = arith.constant dense<0.000000e+00> : vector<8x16xf32>
    %101 = tpu.matmul %99, %100, %cst_31 {dimension_numbers = #tpu.dot_dimension_numbers<[1], [1], [0], [0], [0, 0, 1, 0], [], []>} : vector<8x16xbf16>, vector<16x16xbf16>, vector<8x16xf32> -> vector<8x16xf32>
    %cst_32 = arith.constant 0.000000e+00 : f32
    %102 = vector.broadcast %cst_32 : f32 to vector<8x7xf32>
    %103 = tpu.concatenate %101, %102 in 1 : vector<8x16xf32>, vector<8x7xf32> -> vector<8x23xf32>
    %cst_33 = arith.constant 0.000000e+00 : f32
    %104 = vector.broadcast %cst_33 : f32 to vector<8x16xf32>
    %c0_i32_34 = arith.constant 0 : i32
    %105 = vector.broadcast %c0_i32_34 : i32 to vector<8x16xi32>
    %106 = arith.cmpi eq, %14, %105 : vector<8x16xi32>
    %107 = vector.extract_strided_slice %103 {offsets = [0, 7], sizes = [8, 16], strides = [1, 1]} : vector<8x23xf32> to vector<8x16xf32>
    %108 = arith.select %106, %107, %104 : vector<8x16xi1>, vector<8x16xf32>
    %c1_i32_35 = arith.constant 1 : i32
    %109 = vector.broadcast %c1_i32_35 : i32 to vector<8x16xi32>
    %110 = arith.cmpi eq, %14, %109 : vector<8x16xi32>
    %111 = vector.extract_strided_slice %103 {offsets = [0, 6], sizes = [8, 16], strides = [1, 1]} : vector<8x23xf32> to vector<8x16xf32>
    %112 = arith.select %110, %111, %108 : vector<8x16xi1>, vector<8x16xf32>
    %c2_i32_36 = arith.constant 2 : i32
    %113 = vector.broadcast %c2_i32_36 : i32 to vector<8x16xi32>
    %114 = arith.cmpi eq, %14, %113 : vector<8x16xi32>
    %115 = vector.extract_strided_slice %103 {offsets = [0, 5], sizes = [8, 16], strides = [1, 1]} : vector<8x23xf32> to vector<8x16xf32>
    %116 = arith.select %114, %115, %112 : vector<8x16xi1>, vector<8x16xf32>
    %c3_i32_37 = arith.constant 3 : i32
    %117 = vector.broadcast %c3_i32_37 : i32 to vector<8x16xi32>
    %118 = arith.cmpi eq, %14, %117 : vector<8x16xi32>
    %119 = vector.extract_strided_slice %103 {offsets = [0, 4], sizes = [8, 16], strides = [1, 1]} : vector<8x23xf32> to vector<8x16xf32>
    %120 = arith.select %118, %119, %116 : vector<8x16xi1>, vector<8x16xf32>
    %c4_i32_38 = arith.constant 4 : i32
    %121 = vector.broadcast %c4_i32_38 : i32 to vector<8x16xi32>
    %122 = arith.cmpi eq, %14, %121 : vector<8x16xi32>
    %123 = vector.extract_strided_slice %103 {offsets = [0, 3], sizes = [8, 16], strides = [1, 1]} : vector<8x23xf32> to vector<8x16xf32>
    %124 = arith.select %122, %123, %120 : vector<8x16xi1>, vector<8x16xf32>
    %c5_i32_39 = arith.constant 5 : i32
    %125 = vector.broadcast %c5_i32_39 : i32 to vector<8x16xi32>
    %126 = arith.cmpi eq, %14, %125 : vector<8x16xi32>
    %127 = vector.extract_strided_slice %103 {offsets = [0, 2], sizes = [8, 16], strides = [1, 1]} : vector<8x23xf32> to vector<8x16xf32>
    %128 = arith.select %126, %127, %124 : vector<8x16xi1>, vector<8x16xf32>
    %c6_i32_40 = arith.constant 6 : i32
    %129 = vector.broadcast %c6_i32_40 : i32 to vector<8x16xi32>
    %130 = arith.cmpi eq, %14, %129 : vector<8x16xi32>
    %131 = vector.extract_strided_slice %103 {offsets = [0, 1], sizes = [8, 16], strides = [1, 1]} : vector<8x23xf32> to vector<8x16xf32>
    %132 = arith.select %130, %131, %128 : vector<8x16xi1>, vector<8x16xf32>
    %c7_i32_41 = arith.constant 7 : i32
    %133 = vector.broadcast %c7_i32_41 : i32 to vector<8x16xi32>
    %134 = arith.cmpi eq, %14, %133 : vector<8x16xi32>
    %135 = vector.extract_strided_slice %103 {offsets = [0, 0], sizes = [8, 16], strides = [1, 1]} : vector<8x23xf32> to vector<8x16xf32>
    %136 = arith.select %134, %135, %132 : vector<8x16xi1>, vector<8x16xf32>
    %137 = arith.addf %98, %136 : vector<8x16xf32>
    %cst_42 = arith.constant -1.000000e+30 : f32
    %138 = vector.broadcast %cst_42 : f32 to vector<8x16xf32>
    %139 = arith.select %18, %138, %137 : vector<8x16xi1>, vector<8x16xf32>
    %cst_43 = arith.constant dense<0xFF800000> : vector<8xf32>
    %140 = vector.multi_reduction <maximumf>, %139, %cst_43 [1] : vector<8x16xf32> to vector<8xf32>
    %141 = vector.shape_cast %140 : vector<8xf32> to vector<8x1xf32>
    %142 = vector.broadcast %141 : vector<8x1xf32> to vector<8x16xf32>
    %143 = arith.subf %139, %142 : vector<8x16xf32>
    %144 = math.exp %143 : vector<8x16xf32>
    %cst_44 = arith.constant dense<0.000000e+00> : vector<8xf32>
    %145 = vector.multi_reduction <add>, %144, %cst_44 [1] : vector<8x16xf32> to vector<8xf32>
    %146 = vector.shape_cast %145 : vector<8xf32> to vector<8x1xf32>
    %147 = tpu.reciprocal %146 {approx = true} : vector<8x1xf32> -> vector<8x1xf32>
    %148 = vector.broadcast %147 : vector<8x1xf32> to vector<8x16xf32>
    %149 = arith.mulf %144, %148 : vector<8x16xf32>
    %150 = arith.truncf %149 : vector<8x16xf32> to vector<8x16xbf16>
    %151 = vector.extract_strided_slice %28 {offsets = [0, 16], sizes = [16, 16], strides = [1, 1]} : vector<16x32xbf16> to vector<16x16xbf16>
    %cst_45 = arith.constant dense<0.000000e+00> : vector<8x16xf32>
    %152 = tpu.matmul %150, %151, %cst_45 {dimension_numbers = #tpu.dot_dimension_numbers<[1], [0], [0], [1], [0, 0, 1, 1], [], []>} : vector<8x16xbf16>, vector<16x16xbf16>, vector<8x16xf32> -> vector<8x16xf32>
    %153 = tpu.concatenate %95, %152 in 1 : vector<8x16xf32>, vector<8x16xf32> -> vector<8x32xf32>
    %154 = arith.truncf %153 : vector<8x32xf32> to vector<8x32xbf16>
    %cst_46 = arith.constant dense<0.000000e+00> : vector<8x32xf32>
    %155 = tpu.matmul %154, %7, %cst_46 {dimension_numbers = #tpu.dot_dimension_numbers<[1], [0], [0], [1], [0, 0, 1, 1], [], []>} : vector<8x32xbf16>, vector<32x32xbf16>, vector<8x32xf32> -> vector<8x32xf32>
    %156 = arith.addf %19, %155 : vector<8x32xf32>
    %cst_47 = arith.constant dense<0.000000e+00> : vector<8xf32>
    %157 = vector.multi_reduction <add>, %156, %cst_47 [1] : vector<8x32xf32> to vector<8xf32>
    %158 = vector.shape_cast %157 : vector<8xf32> to vector<8x1xf32>
    %cst_48 = arith.constant 3.200000e+01 : f32
    %159 = vector.broadcast %cst_48 : f32 to vector<8x1xf32>
    %160 = arith.divf %158, %159 : vector<8x1xf32>
    %161 = vector.broadcast %160 : vector<8x1xf32> to vector<8x32xf32>
    %162 = arith.subf %156, %161 : vector<8x32xf32>
    %163 = arith.mulf %162, %162 : vector<8x32xf32>
    %cst_49 = arith.constant dense<0.000000e+00> : vector<8xf32>
    %164 = vector.multi_reduction <add>, %163, %cst_49 [1] : vector<8x32xf32> to vector<8xf32>
    %165 = vector.shape_cast %164 : vector<8xf32> to vector<8x1xf32>
    %cst_50 = arith.constant 3.200000e+01 : f32
    %166 = vector.broadcast %cst_50 : f32 to vector<8x1xf32>
    %167 = arith.divf %165, %166 : vector<8x1xf32>
    %168 = vector.broadcast %160 : vector<8x1xf32> to vector<8x32xf32>
    %169 = arith.subf %156, %168 : vector<8x32xf32>
    %cst_51 = arith.constant 9.99999974E-6 : f32
    %170 = vector.broadcast %cst_51 : f32 to vector<8x1xf32>
    %171 = arith.addf %167, %170 : vector<8x1xf32>
    %172 = math.rsqrt %171 : vector<8x1xf32>
    %173 = vector.broadcast %172 : vector<8x1xf32> to vector<8x32xf32>
    %174 = arith.mulf %169, %173 : vector<8x32xf32>
    %175 = vector.broadcast %0 : vector<1x32xf32> to vector<8x32xf32>
    %176 = arith.mulf %174, %175 : vector<8x32xf32>
    %177 = vector.broadcast %1 : vector<1x32xf32> to vector<8x32xf32>
    %178 = arith.addf %176, %177 : vector<8x32xf32>
    %c0_52 = arith.constant 0 : index
    %c0_53 = arith.constant 0 : index
    %179 = vector.load %arg10[%c0_52, %c0_53] : memref<8x64xf32, #tpu.memory_space<vmem>>, vector<8x32xf32>
    tpu.vector_store %arg10[%c0_52, %c0_53], %178 {strides = array<i32>} : memref<8x64xf32, #tpu.memory_space<vmem>>, vector<8x32xf32>,
    %c0_54 = arith.constant 0 : index
    %c32 = arith.constant 32 : index
    %180 = vector.load %arg0[%c0_54, %c32] : memref<8x64xf32, #tpu.memory_space<vmem>>, vector<8x32xf32>
    %c0_55 = arith.constant 0 : index
    %c32_56 = arith.constant 32 : index
    %181 = vector.load %arg1[%c0_55, %c32_56] : memref<8x64xf32, #tpu.memory_space<vmem>>, vector<8x32xf32>
    %182 = tpu.concatenate %181, %180 in 0 : vector<8x32xf32>, vector<8x32xf32> -> vector<16x32xf32>
    %183 = arith.truncf %182 : vector<16x32xf32> to vector<16x32xbf16>
    %cst_57 = arith.constant dense<0.000000e+00> : vector<16x96xf32>
    %184 = tpu.matmul %183, %5, %cst_57 {dimension_numbers = #tpu.dot_dimension_numbers<[1], [0], [0], [1], [0, 0, 1, 1], [], []>} : vector<16x32xbf16>, vector<32x96xbf16>, vector<16x96xf32> -> vector<16x96xf32>
    %185 = vector.extract_strided_slice %184 {offsets = [8, 0], sizes = [8, 32], strides = [1, 1]} : vector<16x96xf32> to vector<8x32xf32>
    %186 = vector.extract_strided_slice %184 {offsets = [0, 32], sizes = [16, 32], strides = [1, 1]} : vector<16x96xf32> to vector<16x32xf32>
    %187 = arith.truncf %186 : vector<16x32xf32> to vector<16x32xbf16>
    %188 = vector.extract_strided_slice %184 {offsets = [0, 64], sizes = [16, 32], strides = [1, 1]} : vector<16x96xf32> to vector<16x32xf32>
    %189 = arith.truncf %188 : vector<16x32xf32> to vector<16x32xbf16>
    %190 = vector.broadcast %2 : vector<1x32xf32> to vector<8x32xf32>
    %191 = arith.addf %185, %190 : vector<8x32xf32>
    %cst_58 = arith.constant 2.500000e-01 : f32
    %192 = vector.broadcast %cst_58 : f32 to vector<8x32xf32>
    %193 = arith.mulf %191, %192 : vector<8x32xf32>
    %194 = arith.truncf %193 : vector<8x32xf32> to vector<8x32xbf16>
    %195 = vector.broadcast %3 : vector<1x32xf32> to vector<8x32xf32>
    %196 = arith.addf %185, %195 : vector<8x32xf32>
    %cst_59 = arith.constant 2.500000e-01 : f32
    %197 = vector.broadcast %cst_59 : f32 to vector<8x32xf32>
    %198 = arith.mulf %196, %197 : vector<8x32xf32>
    %199 = arith.truncf %198 : vector<8x32xf32> to vector<8x32xbf16>
    %200 = vector.extract_strided_slice %194 {offsets = [0, 0], sizes = [8, 16], strides = [1, 1]} : vector<8x32xbf16> to vector<8x16xbf16>
    %201 = vector.extract_strided_slice %187 {offsets = [0, 0], sizes = [16, 16], strides = [1, 1]} : vector<16x32xbf16> to vector<16x16xbf16>
    %cst_60 = arith.constant dense<0.000000e+00> : vector<8x16xf32>
    %202 = tpu.matmul %200, %201, %cst_60 {dimension_numbers = #tpu.dot_dimension_numbers<[1], [1], [0], [0], [0, 0, 1, 0], [], []>} : vector<8x16xbf16>, vector<16x16xbf16>, vector<8x16xf32> -> vector<8x16xf32>
    %203 = vector.extract_strided_slice %199 {offsets = [0, 0], sizes = [8, 16], strides = [1, 1]} : vector<8x32xbf16> to vector<8x16xbf16>
    %204 = vector.extract_strided_slice %13 {offsets = [0, 0], sizes = [16, 16], strides = [1, 1]} : vector<16x32xbf16> to vector<16x16xbf16>
    %cst_61 = arith.constant dense<0.000000e+00> : vector<8x16xf32>
    %205 = tpu.matmul %203, %204, %cst_61 {dimension_numbers = #tpu.dot_dimension_numbers<[1], [1], [0], [0], [0, 0, 1, 0], [], []>} : vector<8x16xbf16>, vector<16x16xbf16>, vector<8x16xf32> -> vector<8x16xf32>
    %cst_62 = arith.constant 0.000000e+00 : f32
    %206 = vector.broadcast %cst_62 : f32 to vector<8x7xf32>
    %207 = tpu.concatenate %205, %206 in 1 : vector<8x16xf32>, vector<8x7xf32> -> vector<8x23xf32>
    %cst_63 = arith.constant 0.000000e+00 : f32
    %208 = vector.broadcast %cst_63 : f32 to vector<8x16xf32>
    %c0_i32_64 = arith.constant 0 : i32
    %209 = vector.broadcast %c0_i32_64 : i32 to vector<8x16xi32>
    %210 = arith.cmpi eq, %14, %209 : vector<8x16xi32>
    %211 = vector.extract_strided_slice %207 {offsets = [0, 7], sizes = [8, 16], strides = [1, 1]} : vector<8x23xf32> to vector<8x16xf32>
    %212 = arith.select %210, %211, %208 : vector<8x16xi1>, vector<8x16xf32>
    %c1_i32_65 = arith.constant 1 : i32
    %213 = vector.broadcast %c1_i32_65 : i32 to vector<8x16xi32>
    %214 = arith.cmpi eq, %14, %213 : vector<8x16xi32>
    %215 = vector.extract_strided_slice %207 {offsets = [0, 6], sizes = [8, 16], strides = [1, 1]} : vector<8x23xf32> to vector<8x16xf32>
    %216 = arith.select %214, %215, %212 : vector<8x16xi1>, vector<8x16xf32>
    %c2_i32_66 = arith.constant 2 : i32
    %217 = vector.broadcast %c2_i32_66 : i32 to vector<8x16xi32>
    %218 = arith.cmpi eq, %14, %217 : vector<8x16xi32>
    %219 = vector.extract_strided_slice %207 {offsets = [0, 5], sizes = [8, 16], strides = [1, 1]} : vector<8x23xf32> to vector<8x16xf32>
    %220 = arith.select %218, %219, %216 : vector<8x16xi1>, vector<8x16xf32>
    %c3_i32_67 = arith.constant 3 : i32
    %221 = vector.broadcast %c3_i32_67 : i32 to vector<8x16xi32>
    %222 = arith.cmpi eq, %14, %221 : vector<8x16xi32>
    %223 = vector.extract_strided_slice %207 {offsets = [0, 4], sizes = [8, 16], strides = [1, 1]} : vector<8x23xf32> to vector<8x16xf32>
    %224 = arith.select %222, %223, %220 : vector<8x16xi1>, vector<8x16xf32>
    %c4_i32_68 = arith.constant 4 : i32
    %225 = vector.broadcast %c4_i32_68 : i32 to vector<8x16xi32>
    %226 = arith.cmpi eq, %14, %225 : vector<8x16xi32>
    %227 = vector.extract_strided_slice %207 {offsets = [0, 3], sizes = [8, 16], strides = [1, 1]} : vector<8x23xf32> to vector<8x16xf32>
    %228 = arith.select %226, %227, %224 : vector<8x16xi1>, vector<8x16xf32>
    %c5_i32_69 = arith.constant 5 : i32
    %229 = vector.broadcast %c5_i32_69 : i32 to vector<8x16xi32>
    %230 = arith.cmpi eq, %14, %229 : vector<8x16xi32>
    %231 = vector.extract_strided_slice %207 {offsets = [0, 2], sizes = [8, 16], strides = [1, 1]} : vector<8x23xf32> to vector<8x16xf32>
    %232 = arith.select %230, %231, %228 : vector<8x16xi1>, vector<8x16xf32>
    %c6_i32_70 = arith.constant 6 : i32
    %233 = vector.broadcast %c6_i32_70 : i32 to vector<8x16xi32>
    %234 = arith.cmpi eq, %14, %233 : vector<8x16xi32>
    %235 = vector.extract_strided_slice %207 {offsets = [0, 1], sizes = [8, 16], strides = [1, 1]} : vector<8x23xf32> to vector<8x16xf32>
    %236 = arith.select %234, %235, %232 : vector<8x16xi1>, vector<8x16xf32>
    %c7_i32_71 = arith.constant 7 : i32
    %237 = vector.broadcast %c7_i32_71 : i32 to vector<8x16xi32>
    %238 = arith.cmpi eq, %14, %237 : vector<8x16xi32>
    %239 = vector.extract_strided_slice %207 {offsets = [0, 0], sizes = [8, 16], strides = [1, 1]} : vector<8x23xf32> to vector<8x16xf32>
    %240 = arith.select %238, %239, %236 : vector<8x16xi1>, vector<8x16xf32>
    %241 = arith.addf %202, %240 : vector<8x16xf32>
    %cst_72 = arith.constant -1.000000e+30 : f32
    %242 = vector.broadcast %cst_72 : f32 to vector<8x16xf32>
    %243 = arith.select %18, %242, %241 : vector<8x16xi1>, vector<8x16xf32>
    %cst_73 = arith.constant dense<0xFF800000> : vector<8xf32>
    %244 = vector.multi_reduction <maximumf>, %243, %cst_73 [1] : vector<8x16xf32> to vector<8xf32>
    %245 = vector.shape_cast %244 : vector<8xf32> to vector<8x1xf32>
    %246 = vector.broadcast %245 : vector<8x1xf32> to vector<8x16xf32>
    %247 = arith.subf %243, %246 : vector<8x16xf32>
    %248 = math.exp %247 : vector<8x16xf32>
    %cst_74 = arith.constant dense<0.000000e+00> : vector<8xf32>
    %249 = vector.multi_reduction <add>, %248, %cst_74 [1] : vector<8x16xf32> to vector<8xf32>
    %250 = vector.shape_cast %249 : vector<8xf32> to vector<8x1xf32>
    %251 = tpu.reciprocal %250 {approx = true} : vector<8x1xf32> -> vector<8x1xf32>
    %252 = vector.broadcast %251 : vector<8x1xf32> to vector<8x16xf32>
    %253 = arith.mulf %248, %252 : vector<8x16xf32>
    %254 = arith.truncf %253 : vector<8x16xf32> to vector<8x16xbf16>
    %255 = vector.extract_strided_slice %189 {offsets = [0, 0], sizes = [16, 16], strides = [1, 1]} : vector<16x32xbf16> to vector<16x16xbf16>
    %cst_75 = arith.constant dense<0.000000e+00> : vector<8x16xf32>
    %256 = tpu.matmul %254, %255, %cst_75 {dimension_numbers = #tpu.dot_dimension_numbers<[1], [0], [0], [1], [0, 0, 1, 1], [], []>} : vector<8x16xbf16>, vector<16x16xbf16>, vector<8x16xf32> -> vector<8x16xf32>
    %257 = vector.extract_strided_slice %194 {offsets = [0, 16], sizes = [8, 16], strides = [1, 1]} : vector<8x32xbf16> to vector<8x16xbf16>
    %258 = vector.extract_strided_slice %187 {offsets = [0, 16], sizes = [16, 16], strides = [1, 1]} : vector<16x32xbf16> to vector<16x16xbf16>
    %cst_76 = arith.constant dense<0.000000e+00> : vector<8x16xf32>
    %259 = tpu.matmul %257, %258, %cst_76 {dimension_numbers = #tpu.dot_dimension_numbers<[1], [1], [0], [0], [0, 0, 1, 0], [], []>} : vector<8x16xbf16>, vector<16x16xbf16>, vector<8x16xf32> -> vector<8x16xf32>
    %260 = vector.extract_strided_slice %199 {offsets = [0, 16], sizes = [8, 16], strides = [1, 1]} : vector<8x32xbf16> to vector<8x16xbf16>
    %261 = vector.extract_strided_slice %13 {offsets = [0, 16], sizes = [16, 16], strides = [1, 1]} : vector<16x32xbf16> to vector<16x16xbf16>
    %cst_77 = arith.constant dense<0.000000e+00> : vector<8x16xf32>
    %262 = tpu.matmul %260, %261, %cst_77 {dimension_numbers = #tpu.dot_dimension_numbers<[1], [1], [0], [0], [0, 0, 1, 0], [], []>} : vector<8x16xbf16>, vector<16x16xbf16>, vector<8x16xf32> -> vector<8x16xf32>
    %cst_78 = arith.constant 0.000000e+00 : f32
    %263 = vector.broadcast %cst_78 : f32 to vector<8x7xf32>
    %264 = tpu.concatenate %262, %263 in 1 : vector<8x16xf32>, vector<8x7xf32> -> vector<8x23xf32>
    %cst_79 = arith.constant 0.000000e+00 : f32
    %265 = vector.broadcast %cst_79 : f32 to vector<8x16xf32>
    %c0_i32_80 = arith.constant 0 : i32
    %266 = vector.broadcast %c0_i32_80 : i32 to vector<8x16xi32>
    %267 = arith.cmpi eq, %14, %266 : vector<8x16xi32>
    %268 = vector.extract_strided_slice %264 {offsets = [0, 7], sizes = [8, 16], strides = [1, 1]} : vector<8x23xf32> to vector<8x16xf32>
    %269 = arith.select %267, %268, %265 : vector<8x16xi1>, vector<8x16xf32>
    %c1_i32_81 = arith.constant 1 : i32
    %270 = vector.broadcast %c1_i32_81 : i32 to vector<8x16xi32>
    %271 = arith.cmpi eq, %14, %270 : vector<8x16xi32>
    %272 = vector.extract_strided_slice %264 {offsets = [0, 6], sizes = [8, 16], strides = [1, 1]} : vector<8x23xf32> to vector<8x16xf32>
    %273 = arith.select %271, %272, %269 : vector<8x16xi1>, vector<8x16xf32>
    %c2_i32_82 = arith.constant 2 : i32
    %274 = vector.broadcast %c2_i32_82 : i32 to vector<8x16xi32>
    %275 = arith.cmpi eq, %14, %274 : vector<8x16xi32>
    %276 = vector.extract_strided_slice %264 {offsets = [0, 5], sizes = [8, 16], strides = [1, 1]} : vector<8x23xf32> to vector<8x16xf32>
    %277 = arith.select %275, %276, %273 : vector<8x16xi1>, vector<8x16xf32>
    %c3_i32_83 = arith.constant 3 : i32
    %278 = vector.broadcast %c3_i32_83 : i32 to vector<8x16xi32>
    %279 = arith.cmpi eq, %14, %278 : vector<8x16xi32>
    %280 = vector.extract_strided_slice %264 {offsets = [0, 4], sizes = [8, 16], strides = [1, 1]} : vector<8x23xf32> to vector<8x16xf32>
    %281 = arith.select %279, %280, %277 : vector<8x16xi1>, vector<8x16xf32>
    %c4_i32_84 = arith.constant 4 : i32
    %282 = vector.broadcast %c4_i32_84 : i32 to vector<8x16xi32>
    %283 = arith.cmpi eq, %14, %282 : vector<8x16xi32>
    %284 = vector.extract_strided_slice %264 {offsets = [0, 3], sizes = [8, 16], strides = [1, 1]} : vector<8x23xf32> to vector<8x16xf32>
    %285 = arith.select %283, %284, %281 : vector<8x16xi1>, vector<8x16xf32>
    %c5_i32_85 = arith.constant 5 : i32
    %286 = vector.broadcast %c5_i32_85 : i32 to vector<8x16xi32>
    %287 = arith.cmpi eq, %14, %286 : vector<8x16xi32>
    %288 = vector.extract_strided_slice %264 {offsets = [0, 2], sizes = [8, 16], strides = [1, 1]} : vector<8x23xf32> to vector<8x16xf32>
    %289 = arith.select %287, %288, %285 : vector<8x16xi1>, vector<8x16xf32>
    %c6_i32_86 = arith.constant 6 : i32
    %290 = vector.broadcast %c6_i32_86 : i32 to vector<8x16xi32>
    %291 = arith.cmpi eq, %14, %290 : vector<8x16xi32>
    %292 = vector.extract_strided_slice %264 {offsets = [0, 1], sizes = [8, 16], strides = [1, 1]} : vector<8x23xf32> to vector<8x16xf32>
    %293 = arith.select %291, %292, %289 : vector<8x16xi1>, vector<8x16xf32>
    %c7_i32_87 = arith.constant 7 : i32
    %294 = vector.broadcast %c7_i32_87 : i32 to vector<8x16xi32>
    %295 = arith.cmpi eq, %14, %294 : vector<8x16xi32>
    %296 = vector.extract_strided_slice %264 {offsets = [0, 0], sizes = [8, 16], strides = [1, 1]} : vector<8x23xf32> to vector<8x16xf32>
    %297 = arith.select %295, %296, %293 : vector<8x16xi1>, vector<8x16xf32>
    %298 = arith.addf %259, %297 : vector<8x16xf32>
    %cst_88 = arith.constant -1.000000e+30 : f32
    %299 = vector.broadcast %cst_88 : f32 to vector<8x16xf32>
    %300 = arith.select %18, %299, %298 : vector<8x16xi1>, vector<8x16xf32>
    %cst_89 = arith.constant dense<0xFF800000> : vector<8xf32>
    %301 = vector.multi_reduction <maximumf>, %300, %cst_89 [1] : vector<8x16xf32> to vector<8xf32>
    %302 = vector.shape_cast %301 : vector<8xf32> to vector<8x1xf32>
    %303 = vector.broadcast %302 : vector<8x1xf32> to vector<8x16xf32>
    %304 = arith.subf %300, %303 : vector<8x16xf32>
    %305 = math.exp %304 : vector<8x16xf32>
    %cst_90 = arith.constant dense<0.000000e+00> : vector<8xf32>
    %306 = vector.multi_reduction <add>, %305, %cst_90 [1] : vector<8x16xf32> to vector<8xf32>
    %307 = vector.shape_cast %306 : vector<8xf32> to vector<8x1xf32>
    %308 = tpu.reciprocal %307 {approx = true} : vector<8x1xf32> -> vector<8x1xf32>
    %309 = vector.broadcast %308 : vector<8x1xf32> to vector<8x16xf32>
    %310 = arith.mulf %305, %309 : vector<8x16xf32>
    %311 = arith.truncf %310 : vector<8x16xf32> to vector<8x16xbf16>
    %312 = vector.extract_strided_slice %189 {offsets = [0, 16], sizes = [16, 16], strides = [1, 1]} : vector<16x32xbf16> to vector<16x16xbf16>
    %cst_91 = arith.constant dense<0.000000e+00> : vector<8x16xf32>
    %313 = tpu.matmul %311, %312, %cst_91 {dimension_numbers = #tpu.dot_dimension_numbers<[1], [0], [0], [1], [0, 0, 1, 1], [], []>} : vector<8x16xbf16>, vector<16x16xbf16>, vector<8x16xf32> -> vector<8x16xf32>
    %314 = tpu.concatenate %256, %313 in 1 : vector<8x16xf32>, vector<8x16xf32> -> vector<8x32xf32>
    %315 = arith.truncf %314 : vector<8x32xf32> to vector<8x32xbf16>
    %cst_92 = arith.constant dense<0.000000e+00> : vector<8x32xf32>
    %316 = tpu.matmul %315, %7, %cst_92 {dimension_numbers = #tpu.dot_dimension_numbers<[1], [0], [0], [1], [0, 0, 1, 1], [], []>} : vector<8x32xbf16>, vector<32x32xbf16>, vector<8x32xf32> -> vector<8x32xf32>
    %317 = arith.addf %180, %316 : vector<8x32xf32>
    %cst_93 = arith.constant dense<0.000000e+00> : vector<8xf32>
    %318 = vector.multi_reduction <add>, %317, %cst_93 [1] : vector<8x32xf32> to vector<8xf32>
    %319 = vector.shape_cast %318 : vector<8xf32> to vector<8x1xf32>
    %cst_94 = arith.constant 3.200000e+01 : f32
    %320 = vector.broadcast %cst_94 : f32 to vector<8x1xf32>
    %321 = arith.divf %319, %320 : vector<8x1xf32>
    %322 = vector.broadcast %321 : vector<8x1xf32> to vector<8x32xf32>
    %323 = arith.subf %317, %322 : vector<8x32xf32>
    %324 = arith.mulf %323, %323 : vector<8x32xf32>
    %cst_95 = arith.constant dense<0.000000e+00> : vector<8xf32>
    %325 = vector.multi_reduction <add>, %324, %cst_95 [1] : vector<8x32xf32> to vector<8xf32>
    %326 = vector.shape_cast %325 : vector<8xf32> to vector<8x1xf32>
    %cst_96 = arith.constant 3.200000e+01 : f32
    %327 = vector.broadcast %cst_96 : f32 to vector<8x1xf32>
    %328 = arith.divf %326, %327 : vector<8x1xf32>
    %329 = vector.broadcast %321 : vector<8x1xf32> to vector<8x32xf32>
    %330 = arith.subf %317, %329 : vector<8x32xf32>
    %cst_97 = arith.constant 9.99999974E-6 : f32
    %331 = vector.broadcast %cst_97 : f32 to vector<8x1xf32>
    %332 = arith.addf %328, %331 : vector<8x1xf32>
    %333 = math.rsqrt %332 : vector<8x1xf32>
    %334 = vector.broadcast %333 : vector<8x1xf32> to vector<8x32xf32>
    %335 = arith.mulf %330, %334 : vector<8x32xf32>
    %336 = vector.broadcast %0 : vector<1x32xf32> to vector<8x32xf32>
    %337 = arith.mulf %335, %336 : vector<8x32xf32>
    %338 = vector.broadcast %1 : vector<1x32xf32> to vector<8x32xf32>
    %339 = arith.addf %337, %338 : vector<8x32xf32>
    %c0_98 = arith.constant 0 : index
    %c32_99 = arith.constant 32 : index
    %340 = vector.load %arg10[%c0_98, %c32_99] : memref<8x64xf32, #tpu.memory_space<vmem>>, vector<8x32xf32>
    tpu.vector_store %arg10[%c0_98, %c32_99], %339 {strides = array<i32>} : memref<8x64xf32, #tpu.memory_space<vmem>>, vector<8x32xf32>,
    return
  }
}

</mosaic_0001>

<llo_original>
// kernel: rel_multi_head_attn_forward.1
$region0: #{rel_multi_head_attn_forward.1}
  #allocation0 [shape = 'u32[]', space=smem, size = 0x4, offset = 0x4, fixed_abs, tag = 'smem constant byte address 0x4 - core index']
  #allocation1 [shape = 'u32[144,128]{1,0:T(1,128)}', space=vmem, size = 0x12000, scoped, tag = 'internal scratch']
  %s0 = inlined_call_operand.vmem [shape: f32[8,64], index: 0, kind: input, shape index: {}]
  %s1 = inlined_call_operand.vmem [shape: f32[8,64], index: 1, kind: input, shape index: {}]
  %s2 = inlined_call_operand.hbm [shape: f32[16,32], index: 2, kind: input, shape index: {}]
  %s3 = inlined_call_operand.hbm [shape: f32[32,96], index: 3, kind: input, shape index: {}]
  %s4 = inlined_call_operand.vmem [shape: f32[32,32], index: 4, kind: input, shape index: {}]
  %s5 = inlined_call_operand.vmem [shape: f32[32,32], index: 5, kind: input, shape index: {}]
  %s6 = inlined_call_operand.vmem [shape: f32[1,32], index: 6, kind: input, shape index: {}]
  %s7 = inlined_call_operand.vmem [shape: f32[1,32], index: 7, kind: input, shape index: {}]
  %s8 = inlined_call_operand.vmem [shape: f32[1,32], index: 8, kind: input, shape index: {}]
  %s9 = inlined_call_operand.vmem [shape: f32[1,32], index: 9, kind: input, shape index: {}]
  %s10 = inlined_call_operand.vmem [shape: f32[8,64], index: 10, kind: output, shape index: {}]
  %s11 = sld [smem:[#allocation0]]
  $region58: #{rel_multi_head_attn_forward.1} parent=0
    _
  %s13 = ssub.s32 1, %s11
  %s14 = scalar_select 0, %s13, %s11
  $region1: #{rel_multi_head_attn_forward.1} parent=0
    #allocation2 [shape = 'u8[8192]{0}', space=vmem, size = 0x2000, scoped, tag = 'input window, operand 2, single buffered']
    #allocation3 [shape = 's32[1]{0}', space=sflag, size = 0x4, scoped, tag = 'scoped memory for rel_multi_head_attn_forward.1']
    #allocation4 [shape = 'u8[16384]{0}', space=vmem, size = 0x4000, scoped, tag = 'input window, operand 3, single buffered']
    #allocation5 [shape = 's32[1]{0}', space=sflag, size = 0x4, scoped, tag = 'scoped memory for rel_multi_head_attn_forward.1']
    %15 = vsyncpa [#allocation3], 0
    %16 = vsyncpa [#allocation5], 0
    // Predicated region
    $region2: #{rel_multi_head_attn_forward.1} parent=1 // pred_check
      _
    $region3: #{rel_multi_head_attn_forward.1} parent=1 // pred_check_branch
      %18 = sbr.rel (0) target = $region5
    $region4: #{rel_multi_head_attn_forward.1} parent=1 // pred_region
      _
    $region5: #{rel_multi_head_attn_forward.1} parent=1 // pred_fallthru
      _
    // Predicated region
    $region6: #{rel_multi_head_attn_forward.1} parent=1 // pred_check
      _
    $region7: #{rel_multi_head_attn_forward.1} parent=1 // pred_check_branch
      %20 = sbr.rel (0) target = $region9
    $region8: #{rel_multi_head_attn_forward.1} parent=1 // pred_region
      _
    $region9: #{rel_multi_head_attn_forward.1} parent=1 // pred_fallthru
      _
    // Predicated region
    $region10: #{rel_multi_head_attn_forward.1} parent=1 // pred_check
      _
    $region11: #{rel_multi_head_attn_forward.1} parent=1 // pred_check_branch
      %22 = sbr.rel (0) target = $region13
    $region12: #{rel_multi_head_attn_forward.1} parent=1 // pred_region
      %s24 = ssub.s32 256, 256
      %25 = vsyncadd [#allocation3], %s24
      %s26 = sshll.u32 [#allocation2], 4
      %s27 = int_to_ptr.vmem [resolvable:$true] %s26
      %32 = dma.hbm_to_vmem [thread:$0]  %s2, 256, %s27, [#allocation3], 128, 128, 8
    $region13: #{rel_multi_head_attn_forward.1} parent=1 // pred_fallthru
      _
    // Predicated region
    $region14: #{rel_multi_head_attn_forward.1} parent=1 // pred_check
      _
    $region15: #{rel_multi_head_attn_forward.1} parent=1 // pred_check_branch
      %34 = sbr.rel (0) target = $region17
    $region16: #{rel_multi_head_attn_forward.1} parent=1 // pred_region
      %s36 = ssub.s32 512, 512
      %37 = vsyncadd [#allocation5], %s36
      %s38 = sshll.u32 [#allocation4], 4
      %s39 = int_to_ptr.vmem [resolvable:$true] %s38
      %44 = dma.hbm_to_vmem [thread:$0]  %s3, 512, %s39, [#allocation5], 128, 128, 8
    $region17: #{rel_multi_head_attn_forward.1} parent=1 // pred_fallthru
      _
    // Predicated region
    $region18: #{rel_multi_head_attn_forward.1} parent=1 // pred_check
      _
    $region19: #{rel_multi_head_attn_forward.1} parent=1 // pred_check_branch
      %46 = sbr.rel (0) target = $region21
    $region20: #{rel_multi_head_attn_forward.1} parent=1 // pred_region
      _
    $region21: #{rel_multi_head_attn_forward.1} parent=1 // pred_fallthru
      _
    // Predicated region
    $region22: #{rel_multi_head_attn_forward.1} parent=1 // pred_check
      _
    $region23: #{rel_multi_head_attn_forward.1} parent=1 // pred_check_branch
      %48 = sbr.rel (0) target = $region25
    $region24: #{rel_multi_head_attn_forward.1} parent=1 // pred_region
      _
    $region25: #{rel_multi_head_attn_forward.1} parent=1 // pred_fallthru
      _
    // Predicated region
    $region26: #{rel_multi_head_attn_forward.1} parent=1 // pred_check
      _
    $region27: #{rel_multi_head_attn_forward.1} parent=1 // pred_check_branch
      %50 = sbr.rel (0) target = $region29
    $region28: #{rel_multi_head_attn_forward.1} parent=1 // pred_region
      _
    $region29: #{rel_multi_head_attn_forward.1} parent=1 // pred_fallthru
      _
    // Predicated region
    $region30: #{rel_multi_head_attn_forward.1} parent=1 // pred_check
      _
    $region31: #{rel_multi_head_attn_forward.1} parent=1 // pred_check_branch
      %52 = sbr.rel (0) target = $region33
    $region32: #{rel_multi_head_attn_forward.1} parent=1 // pred_region
      _
    $region33: #{rel_multi_head_attn_forward.1} parent=1 // pred_fallthru
      _
    // Predicated region
    $region34: #{rel_multi_head_attn_forward.1} parent=1 // pred_check
      _
    $region35: #{rel_multi_head_attn_forward.1} parent=1 // pred_check_branch
      %54 = sbr.rel (0) target = $region37
    $region36: #{rel_multi_head_attn_forward.1} parent=1 // pred_region
      _
    $region37: #{rel_multi_head_attn_forward.1} parent=1 // pred_fallthru
      _
    // Predicated region
    $region38: #{rel_multi_head_attn_forward.1} parent=1 // pred_check
      _
    $region39: #{rel_multi_head_attn_forward.1} parent=1 // pred_check_branch
      %56 = sbr.rel (0) target = $region41
    $region40: #{rel_multi_head_attn_forward.1} parent=1 // pred_region
      _
    $region41: #{rel_multi_head_attn_forward.1} parent=1 // pred_fallthru
      _
    // Predicated region
    $region42: #{rel_multi_head_attn_forward.1} parent=1 // pred_check
      _
    $region43: #{rel_multi_head_attn_forward.1} parent=1 // pred_check_branch
      %58 = sbr.rel (0) target = $region45
    $region44: #{rel_multi_head_attn_forward.1} parent=1 // pred_region
      %59 = dma.done [#allocation3], 256
    $region45: #{rel_multi_head_attn_forward.1} parent=1 // pred_fallthru
      _
    // Predicated region
    $region46: #{rel_multi_head_attn_forward.1} parent=1 // pred_check
      _
    $region47: #{rel_multi_head_attn_forward.1} parent=1 // pred_check_branch
      %61 = sbr.rel (0) target = $region49
    $region48: #{rel_multi_head_attn_forward.1} parent=1 // pred_region
      %62 = dma.done [#allocation5], 512
    $region49: #{rel_multi_head_attn_forward.1} parent=1 // pred_fallthru
      _
    %v64 = vld [vmem:[%s8] sm:$0x1]
    %v65 = vld [vmem:[%s9] sm:$0x1]
    %v66 = vld [vmem:[%s6] sm:$0x1]
    %v67 = vld [vmem:[%s7] sm:$0x1]
    %v68 = vld [vmem:[#allocation4] sm:$0xff]
    %v69 = vld [vmem:[#allocation4 + $0x8] sm:$0xff]
    %v70 = vld [vmem:[#allocation4 + $0x10] sm:$0xff]
    %v71 = vld [vmem:[#allocation4 + $0x18] sm:$0xff]
    %v72 = vpack.c.bf16 %v69, %v68
    %v73 = vpack.c.bf16 %v71, %v70
    %v74 = vld [vmem:[%s5] sm:$0xff]
    %v75 = vld [vmem:[%s5 + $0x8] sm:$0xff]
    %v76 = vld [vmem:[%s5 + $0x10] sm:$0xff]
    %v77 = vld [vmem:[%s5 + $0x18] sm:$0xff]
    %v78 = vpack.c.bf16 %v75, %v74
    %v79 = vpack.c.bf16 %v77, %v76
    %v80 = vld [vmem:[#allocation2] sm:$0xff]
    %v81 = vld [vmem:[#allocation2 + $0x8] sm:$0xff]
    %v82 = vpack.c.bf16 %v81, %v80
    %v83 = vld [vmem:[%s4] sm:$0xff]
    %v84 = vld [vmem:[%s4 + $0x8] sm:$0xff]
    %v85 = vld [vmem:[%s4 + $0x10] sm:$0xff]
    %v86 = vld [vmem:[%s4 + $0x18] sm:$0xff]
    %v87 = vpack.c.bf16 %v84, %v83
    %v88 = vpack.c.bf16 %v86, %v85
    %vm89 = vcmask 261120
    %v91 = vsel %vm89, %v82, 0
    %93 = vmatprep.subr.bf16.mxu0 0
    %94 = vmatpush1.bf16.msra.mxu0 %v87
    %95 = vmatprep.subr.bf16.mxu0 0
    %96 = vmatpush1.bf16.msra.mxu0 %v88
    %97 = vmatprep.subr.bf16.mxu0 0
    %98 = vmatpush1.bf16.msra.mxu0 0
    %99 = vmatprep.subr.bf16.mxu0 0
    %100 = vmatpush1.bf16.msra.mxu0 0
    %101 = vmatprep.subr.bf16.mxu0 0
    %102 = vmatpush1.bf16.msra.mxu0 0
    %103 = vmatprep.subr.bf16.mxu0 0
    %104 = vmatpush1.bf16.msra.mxu0 0
    %105 = vmatprep.subr.bf16.mxu0 0
    %106 = vmatpush1.bf16.msra.mxu0 0
    %107 = vmatprep.subr.bf16.mxu0 0
    %108 = vmatpush1.bf16.msra.mxu0 0
    %109 = vmatprep.subr.bf16.mxu0 0
    %110 = vmatpush1.bf16.msra.mxu0 0
    %111 = vmatprep.subr.bf16.mxu0 0
    %112 = vmatpush1.bf16.msra.mxu0 0
    %113 = vmatprep.subr.bf16.mxu0 0
    %114 = vmatpush1.bf16.msra.mxu0 0
    %115 = vmatprep.subr.bf16.mxu0 0
    %116 = vmatpush1.bf16.msra.mxu0 0
    %117 = vmatprep.subr.bf16.mxu0 0
    %118 = vmatpush1.bf16.msra.mxu0 0
    %119 = vmatprep.subr.bf16.mxu0 0
    %120 = vmatpush1.bf16.msra.mxu0 0
    %121 = vmatprep.subr.bf16.mxu0 0
    %122 = vmatpush1.bf16.msra.mxu0 0
    %123 = vmatprep.subr.bf16.mxu0 0
    %124 = vmatpush1.bf16.msra.mxu0 0
    %125 = vmatprep.mubr.bf16.mxu0 0
    %126 = vmatmul.mubr.bf16.gmra.mrb[0].mxu0 %v91
    %v127 = vpop.f32.mrb[0].mxu0
    %v128 = vadd.f32 0.0, %v127
    %v129 = vpop.f32.mrb[0].mxu0
    %v130 = vpop.f32.mrb[0].mxu0
    %v131 = vadd.f32 0.0, %v130
    %v132 = vpop.f32.mrb[0].mxu0
    %133 = vdwg.mxu0
    %v134 = vpack.c.bf16 %v131, %v128
    %v135 = vlaneseq
    %v136 = vshrl.u32 %v135, 7
    %v137 = vlaneseq
    %v138 = vand.u32 %v137, 127
    %v139 = vadd.s32 %v136, 8
    %vm140 = vcmp.gt.s32.totalorder %v138, %v139
    %v141 = vld [vmem:[%s0] sm:$0xff]
    %v142 = vld [vmem:[%s1] sm:$0xff]
    %v143 = vpack.c.bf16 %v141, %v142
    %v145 = vsel %vm89, %v143, 0
    %147 = vmatprep.subr.bf16.mxu0 0
    %148 = vmatpush1.bf16.msra.mxu0 %v72
    %149 = vmatprep.subr.bf16.mxu0 0
    %150 = vmatpush1.bf16.msra.mxu0 %v73
    %151 = vmatprep.subr.bf16.mxu0 0
    %152 = vmatpush1.bf16.msra.mxu0 0
    %153 = vmatprep.subr.bf16.mxu0 0
    %154 = vmatpush1.bf16.msra.mxu0 0
    %155 = vmatprep.subr.bf16.mxu0 0
    %156 = vmatpush1.bf16.msra.mxu0 0
    %157 = vmatprep.subr.bf16.mxu0 0
    %158 = vmatpush1.bf16.msra.mxu0 0
    %159 = vmatprep.subr.bf16.mxu0 0
    %160 = vmatpush1.bf16.msra.mxu0 0
    %161 = vmatprep.subr.bf16.mxu0 0
    %162 = vmatpush1.bf16.msra.mxu0 0
    %163 = vmatprep.subr.bf16.mxu0 0
    %164 = vmatpush1.bf16.msra.mxu0 0
    %165 = vmatprep.subr.bf16.mxu0 0
    %166 = vmatpush1.bf16.msra.mxu0 0
    %167 = vmatprep.subr.bf16.mxu0 0
    %168 = vmatpush1.bf16.msra.mxu0 0
    %169 = vmatprep.subr.bf16.mxu0 0
    %170 = vmatpush1.bf16.msra.mxu0 0
    %171 = vmatprep.subr.bf16.mxu0 0
    %172 = vmatpush1.bf16.msra.mxu0 0
    %173 = vmatprep.subr.bf16.mxu0 0
    %174 = vmatpush1.bf16.msra.mxu0 0
    %175 = vmatprep.subr.bf16.mxu0 0
    %176 = vmatpush1.bf16.msra.mxu0 0
    %177 = vmatprep.subr.bf16.mxu0 0
    %178 = vmatpush1.bf16.msra.mxu0 0
    %179 = vmatprep.mubr.bf16.mxu0 0
    %180 = vmatmul.mubr.bf16.gmra.mrb[0].mxu0 %v145
    %v181 = vpop.f32.mrb[0].mxu0
    %v182 = vadd.f32 0.0, %v181
    %v183 = vpop.f32.mrb[0].mxu0
    %v184 = vpop.f32.mrb[0].mxu0
    %v185 = vadd.f32 0.0, %v184
    %v186 = vpop.f32.mrb[0].mxu0
    %187 = vdwg.mxu0
    %v188 = vpack.c.bf16 %v185, %v182
    %v190 = vlaneseq
    %v191 = vshrl.u32 %v190, 7
    %v192 = vsub.s32 0, %v191
    %v193 = vrot.slane %v66, %v192
    %v195 = vadd.f32 %v185, %v193
    %v196 = vmul.f32 %v195, 0.25
    %v197 = vpack.c.bf16 %v196, %v196
    %v199 = vlaneseq
    %v200 = vshrl.u32 %v199, 7
    %v201 = vsub.s32 0, %v200
    %v202 = vrot.slane %v67, %v201
    %v204 = vadd.f32 %v185, %v202
    %v205 = vmul.f32 %v204, 0.25
    %v206 = vpack.c.bf16 %v205, %v205
    %vm207 = vcmask 130048
    %v209 = vsel %vm207, %v206, 0
    %v212 = vsel %vm207, %v134, 0
    %214 = vmatprep.subr.bf16.mxu0 0
    %215 = vmatpush1.bf16.xpose.msra.mxu0 %v212
    %216 = vmatprep.subr.bf16.mxu0 0
    %217 = vmatpush1.bf16.xpose.msra.mxu0 0
    %218 = vmatprep.subr.bf16.mxu0 0
    %219 = vmatpush1.bf16.xpose.msra.mxu0 0
    %220 = vmatprep.subr.bf16.mxu0 0
    %221 = vmatpush1.bf16.xpose.msra.mxu0 0
    %222 = vmatprep.subr.bf16.mxu0 0
    %223 = vmatpush1.bf16.xpose.msra.mxu0 0
    %224 = vmatprep.subr.bf16.mxu0 0
    %225 = vmatpush1.bf16.xpose.msra.mxu0 0
    %226 = vmatprep.subr.bf16.mxu0 0
    %227 = vmatpush1.bf16.xpose.msra.mxu0 0
    %228 = vmatprep.subr.bf16.mxu0 0
    %229 = vmatpush1.bf16.xpose.msra.mxu0 0
    %230 = vmatprep.subr.bf16.mxu0 0
    %231 = vmatpush1.bf16.xpose.msra.mxu0 0
    %232 = vmatprep.subr.bf16.mxu0 0
    %233 = vmatpush1.bf16.xpose.msra.mxu0 0
    %234 = vmatprep.subr.bf16.mxu0 0
    %235 = vmatpush1.bf16.xpose.msra.mxu0 0
    %236 = vmatprep.subr.bf16.mxu0 0
    %237 = vmatpush1.bf16.xpose.msra.mxu0 0
    %238 = vmatprep.subr.bf16.mxu0 0
    %239 = vmatpush1.bf16.xpose.msra.mxu0 0
    %240 = vmatprep.subr.bf16.mxu0 0
    %241 = vmatpush1.bf16.xpose.msra.mxu0 0
    %242 = vmatprep.subr.bf16.mxu0 0
    %243 = vmatpush1.bf16.xpose.msra.mxu0 0
    %244 = vmatprep.subr.bf16.mxu0 0
    %245 = vmatpush1.bf16.xpose.msra.mxu0 0
    %246 = vmatprep.mubr.bf16.mxu0 0
    %247 = vmatmul.mubr.bf16.gmra.mrb[0].mxu0 %v209
    %v248 = vpop.f32.mrb[0].mxu0
    %v249 = vadd.f32 0.0, %v248
    %v250 = vpop.f32.mrb[0].mxu0
    %v251 = vpop.f32.mrb[0].mxu0
    %v252 = vpop.f32.mrb[0].mxu0
    %253 = vdwg.mxu0
    %v254 = vsel %vm207, %v249, 0.0
    %vm255 = vcmp.eq.s32.totalorder %v136, 0
    %v256 = vsel %vm255, %v254, 0.0
    %vm257 = vcmp.eq.s32.totalorder %v136, 1
    %259 = vrot.lane.b32.xlu0 %v256, 127
    %v260 = vpop.permute.xlu0 %259
    %v262 = vsel %vm257, %v254, %v260
    %vm263 = vcmp.eq.s32.totalorder %v136, 2
    %265 = vrot.lane.b32.xlu0 %v262, 127
    %v266 = vpop.permute.xlu0 %265
    %v268 = vsel %vm263, %v254, %v266
    %vm269 = vcmp.eq.s32.totalorder %v136, 3
    %271 = vrot.lane.b32.xlu0 %v268, 127
    %v272 = vpop.permute.xlu0 %271
    %v274 = vsel %vm269, %v254, %v272
    %vm275 = vcmp.eq.s32.totalorder %v136, 4
    %277 = vrot.lane.b32.xlu0 %v274, 127
    %v278 = vpop.permute.xlu0 %277
    %v280 = vsel %vm275, %v254, %v278
    %vm281 = vcmp.eq.s32.totalorder %v136, 5
    %283 = vrot.lane.b32.xlu0 %v280, 127
    %v284 = vpop.permute.xlu0 %283
    %v286 = vsel %vm281, %v254, %v284
    %vm287 = vcmp.eq.s32.totalorder %v136, 6
    %289 = vrot.lane.b32.xlu0 %v286, 127
    %v290 = vpop.permute.xlu0 %289
    %v292 = vsel %vm287, %v254, %v290
    %vm293 = vcmp.eq.s32.totalorder %v136, 7
    %295 = vrot.lane.b32.xlu0 %v292, 127
    %v296 = vpop.permute.xlu0 %295
    %v298 = vsel %vm293, %v254, %v296
    %300 = vrot.lane.b32.xlu0 %v188, 96
    %v301 = vpop.permute.xlu0 %300
    %v303 = vsel %vm207, %v197, 0
    %v306 = vsel %vm207, %v301, 0
    %308 = vmatprep.subr.bf16.mxu0 0
    %309 = vmatpush1.bf16.xpose.msra.mxu0 %v306
    %310 = vmatprep.subr.bf16.mxu0 0
    %311 = vmatpush1.bf16.xpose.msra.mxu0 0
    %312 = vmatprep.subr.bf16.mxu0 0
    %313 = vmatpush1.bf16.xpose.msra.mxu0 0
    %314 = vmatprep.subr.bf16.mxu0 0
    %315 = vmatpush1.bf16.xpose.msra.mxu0 0
    %316 = vmatprep.subr.bf16.mxu0 0
    %317 = vmatpush1.bf16.xpose.msra.mxu0 0
    %318 = vmatprep.subr.bf16.mxu0 0
    %319 = vmatpush1.bf16.xpose.msra.mxu0 0
    %320 = vmatprep.subr.bf16.mxu0 0
    %321 = vmatpush1.bf16.xpose.msra.mxu0 0
    %322 = vmatprep.subr.bf16.mxu0 0
    %323 = vmatpush1.bf16.xpose.msra.mxu0 0
    %324 = vmatprep.subr.bf16.mxu0 0
    %325 = vmatpush1.bf16.xpose.msra.mxu0 0
    %326 = vmatprep.subr.bf16.mxu0 0
    %327 = vmatpush1.bf16.xpose.msra.mxu0 0
    %328 = vmatprep.subr.bf16.mxu0 0
    %329 = vmatpush1.bf16.xpose.msra.mxu0 0
    %330 = vmatprep.subr.bf16.mxu0 0
    %331 = vmatpush1.bf16.xpose.msra.mxu0 0
    %332 = vmatprep.subr.bf16.mxu0 0
    %333 = vmatpush1.bf16.xpose.msra.mxu0 0
    %334 = vmatprep.subr.bf16.mxu0 0
    %335 = vmatpush1.bf16.xpose.msra.mxu0 0
    %336 = vmatprep.subr.bf16.mxu0 0
    %337 = vmatpush1.bf16.xpose.msra.mxu0 0
    %338 = vmatprep.subr.bf16.mxu0 0
    %339 = vmatpush1.bf16.xpose.msra.mxu0 0
    %340 = vmatprep.mubr.bf16.mxu0 0
    %341 = vmatmul.mubr.bf16.gmra.mrb[0].mxu0 %v303
    %v342 = vpop.f32.mrb[0].mxu0
    %v343 = vadd.f32 %v298, %v342
    %v344 = vpop.f32.mrb[0].mxu0
    %v345 = vpop.f32.mrb[0].mxu0
    %v346 = vpop.f32.mrb[0].mxu0
    %347 = vdwg.mxu0
    %v348 = vsel %vm140, -1e+30, %v343
    %v349 = vsel %vm207, %v348, -inf
    %350 = vmax.xlane.f32.xlu0 %v349
    %v351 = vpop.xlane.xlu0 %350
    %v352 = vsub.f32 %v348, %v351
    %v353 = vmul.f32 %v352, 1.442695
    %v354 = vpow.pop %v353
    %v355 = vsel %vm207, %v354, 0.0
    %356 = vadd.xlane.f32.xlu0 %v355
    %v357 = vpop.xlane.xlu0 %356
    %v358 = vrcp.pop %v357
    %v359 = vmul.f32 %v354, %v358
    %v360 = vpack.c.bf16 %v359, %v359
    %361 = vrot.lane.b32.xlu0 %v188, 64
    %v362 = vpop.permute.xlu0 %361
    %v365 = vsel %vm207, %v360, 0
    %367 = vmatprep.subr.bf16.mxu0 0
    %368 = vmatpush1.bf16.msra.mxu0 %v362
    %369 = vmatprep.subr.bf16.mxu0 0
    %370 = vmatpush1.bf16.msra.mxu0 0
    %371 = vmatprep.subr.bf16.mxu0 0
    %372 = vmatpush1.bf16.msra.mxu0 0
    %373 = vmatprep.subr.bf16.mxu0 0
    %374 = vmatpush1.bf16.msra.mxu0 0
    %375 = vmatprep.subr.bf16.mxu0 0
    %376 = vmatpush1.bf16.msra.mxu0 0
    %377 = vmatprep.subr.bf16.mxu0 0
    %378 = vmatpush1.bf16.msra.mxu0 0
    %379 = vmatprep.subr.bf16.mxu0 0
    %380 = vmatpush1.bf16.msra.mxu0 0
    %381 = vmatprep.subr.bf16.mxu0 0
    %382 = vmatpush1.bf16.msra.mxu0 0
    %383 = vmatprep.subr.bf16.mxu0 0
    %384 = vmatpush1.bf16.msra.mxu0 0
    %385 = vmatprep.subr.bf16.mxu0 0
    %386 = vmatpush1.bf16.msra.mxu0 0
    %387 = vmatprep.subr.bf16.mxu0 0
    %388 = vmatpush1.bf16.msra.mxu0 0
    %389 = vmatprep.subr.bf16.mxu0 0
    %390 = vmatpush1.bf16.msra.mxu0 0
    %391 = vmatprep.subr.bf16.mxu0 0
    %392 = vmatpush1.bf16.msra.mxu0 0
    %393 = vmatprep.subr.bf16.mxu0 0
    %394 = vmatpush1.bf16.msra.mxu0 0
    %395 = vmatprep.subr.bf16.mxu0 0
    %396 = vmatpush1.bf16.msra.mxu0 0
    %397 = vmatprep.subr.bf16.mxu0 0
    %398 = vmatpush1.bf16.msra.mxu0 0
    %399 = vmatprep.mubr.bf16.mxu0 0
    %400 = vmatmul.mubr.bf16.gmra.mrb[0].mxu0 %v365
    %v401 = vpop.f32.mrb[0].mxu0
    %v402 = vadd.f32 0.0, %v401
    %v403 = vpop.f32.mrb[0].mxu0
    %v404 = vpop.f32.mrb[0].mxu0
    %v405 = vpop.f32.mrb[0].mxu0
    %406 = vdwg.mxu0
    %408 = vrot.lane.b32.xlu0 %v206, 112
    %v409 = vpop.permute.xlu0 %408
    %411 = vrot.lane.b32.xlu0 %v134, 112
    %v412 = vpop.permute.xlu0 %411
    %v414 = vsel %vm207, %v409, 0
    %v417 = vsel %vm207, %v412, 0
    %419 = vmatprep.subr.bf16.mxu0 0
    %420 = vmatpush1.bf16.xpose.msra.mxu0 %v417
    %421 = vmatprep.subr.bf16.mxu0 0
    %422 = vmatpush1.bf16.xpose.msra.mxu0 0
    %423 = vmatprep.subr.bf16.mxu0 0
    %424 = vmatpush1.bf16.xpose.msra.mxu0 0
    %425 = vmatprep.subr.bf16.mxu0 0
    %426 = vmatpush1.bf16.xpose.msra.mxu0 0
    %427 = vmatprep.subr.bf16.mxu0 0
    %428 = vmatpush1.bf16.xpose.msra.mxu0 0
    %429 = vmatprep.subr.bf16.mxu0 0
    %430 = vmatpush1.bf16.xpose.msra.mxu0 0
    %431 = vmatprep.subr.bf16.mxu0 0
    %432 = vmatpush1.bf16.xpose.msra.mxu0 0
    %433 = vmatprep.subr.bf16.mxu0 0
    %434 = vmatpush1.bf16.xpose.msra.mxu0 0
    %435 = vmatprep.subr.bf16.mxu0 0
    %436 = vmatpush1.bf16.xpose.msra.mxu0 0
    %437 = vmatprep.subr.bf16.mxu0 0
    %438 = vmatpush1.bf16.xpose.msra.mxu0 0
    %439 = vmatprep.subr.bf16.mxu0 0
    %440 = vmatpush1.bf16.xpose.msra.mxu0 0
    %441 = vmatprep.subr.bf16.mxu0 0
    %442 = vmatpush1.bf16.xpose.msra.mxu0 0
    %443 = vmatprep.subr.bf16.mxu0 0
    %444 = vmatpush1.bf16.xpose.msra.mxu0 0
    %445 = vmatprep.subr.bf16.mxu0 0
    %446 = vmatpush1.bf16.xpose.msra.mxu0 0
    %447 = vmatprep.subr.bf16.mxu0 0
    %448 = vmatpush1.bf16.xpose.msra.mxu0 0
    %449 = vmatprep.subr.bf16.mxu0 0
    %450 = vmatpush1.bf16.xpose.msra.mxu0 0
    %451 = vmatprep.mubr.bf16.mxu0 0
    %452 = vmatmul.mubr.bf16.gmra.mrb[0].mxu0 %v414
    %v453 = vpop.f32.mrb[0].mxu0
    %v454 = vadd.f32 0.0, %v453
    %v455 = vpop.f32.mrb[0].mxu0
    %v456 = vpop.f32.mrb[0].mxu0
    %v457 = vpop.f32.mrb[0].mxu0
    %458 = vdwg.mxu0
    %v459 = vsel %vm207, %v454, 0.0
    %v460 = vsel %vm255, %v459, 0.0
    %462 = vrot.lane.b32.xlu0 %v460, 127
    %v463 = vpop.permute.xlu0 %462
    %v465 = vsel %vm257, %v459, %v463
    %467 = vrot.lane.b32.xlu0 %v465, 127
    %v468 = vpop.permute.xlu0 %467
    %v470 = vsel %vm263, %v459, %v468
    %472 = vrot.lane.b32.xlu0 %v470, 127
    %v473 = vpop.permute.xlu0 %472
    %v475 = vsel %vm269, %v459, %v473
    %477 = vrot.lane.b32.xlu0 %v475, 127
    %v478 = vpop.permute.xlu0 %477
    %v480 = vsel %vm275, %v459, %v478
    %482 = vrot.lane.b32.xlu0 %v480, 127
    %v483 = vpop.permute.xlu0 %482
    %v485 = vsel %vm281, %v459, %v483
    %487 = vrot.lane.b32.xlu0 %v485, 127
    %v488 = vpop.permute.xlu0 %487
    %v490 = vsel %vm287, %v459, %v488
    %492 = vrot.lane.b32.xlu0 %v490, 127
    %v493 = vpop.permute.xlu0 %492
    %v495 = vsel %vm293, %v459, %v493
    %497 = vrot.lane.b32.xlu0 %v197, 112
    %v498 = vpop.permute.xlu0 %497
    %499 = vrot.lane.b32.xlu0 %v188, 80
    %v500 = vpop.permute.xlu0 %499
    %v502 = vsel %vm207, %v498, 0
    %v505 = vsel %vm207, %v500, 0
    %507 = vmatprep.subr.bf16.mxu0 0
    %508 = vmatpush1.bf16.xpose.msra.mxu0 %v505
    %509 = vmatprep.subr.bf16.mxu0 0
    %510 = vmatpush1.bf16.xpose.msra.mxu0 0
    %511 = vmatprep.subr.bf16.mxu0 0
    %512 = vmatpush1.bf16.xpose.msra.mxu0 0
    %513 = vmatprep.subr.bf16.mxu0 0
    %514 = vmatpush1.bf16.xpose.msra.mxu0 0
    %515 = vmatprep.subr.bf16.mxu0 0
    %516 = vmatpush1.bf16.xpose.msra.mxu0 0
    %517 = vmatprep.subr.bf16.mxu0 0
    %518 = vmatpush1.bf16.xpose.msra.mxu0 0
    %519 = vmatprep.subr.bf16.mxu0 0
    %520 = vmatpush1.bf16.xpose.msra.mxu0 0
    %521 = vmatprep.subr.bf16.mxu0 0
    %522 = vmatpush1.bf16.xpose.msra.mxu0 0
    %523 = vmatprep.subr.bf16.mxu0 0
    %524 = vmatpush1.bf16.xpose.msra.mxu0 0
    %525 = vmatprep.subr.bf16.mxu0 0
    %526 = vmatpush1.bf16.xpose.msra.mxu0 0
    %527 = vmatprep.subr.bf16.mxu0 0
    %528 = vmatpush1.bf16.xpose.msra.mxu0 0
    %529 = vmatprep.subr.bf16.mxu0 0
    %530 = vmatpush1.bf16.xpose.msra.mxu0 0
    %531 = vmatprep.subr.bf16.mxu0 0
    %532 = vmatpush1.bf16.xpose.msra.mxu0 0
    %533 = vmatprep.subr.bf16.mxu0 0
    %534 = vmatpush1.bf16.xpose.msra.mxu0 0
    %535 = vmatprep.subr.bf16.mxu0 0
    %536 = vmatpush1.bf16.xpose.msra.mxu0 0
    %537 = vmatprep.subr.bf16.mxu0 0
    %538 = vmatpush1.bf16.xpose.msra.mxu0 0
    %539 = vmatprep.mubr.bf16.mxu0 0
    %540 = vmatmul.mubr.bf16.gmra.mrb[0].mxu0 %v502
    %v541 = vpop.f32.mrb[0].mxu0
    %v542 = vadd.f32 %v495, %v541
    %v543 = vpop.f32.mrb[0].mxu0
    %v544 = vpop.f32.mrb[0].mxu0
    %v545 = vpop.f32.mrb[0].mxu0
    %546 = vdwg.mxu0
    %v547 = vsel %vm140, -1e+30, %v542
    %v548 = vsel %vm207, %v547, -inf
    %549 = vmax.xlane.f32.xlu0 %v548
    %v550 = vpop.xlane.xlu0 %549
    %v551 = vsub.f32 %v547, %v550
    %v552 = vmul.f32 %v551, 1.442695
    %v553 = vpow.pop %v552
    %v554 = vsel %vm207, %v553, 0.0
    %555 = vadd.xlane.f32.xlu0 %v554
    %v556 = vpop.xlane.xlu0 %555
    %v557 = vrcp.pop %v556
    %v558 = vmul.f32 %v553, %v557
    %v559 = vpack.c.bf16 %v558, %v558
    %560 = vrot.lane.b32.xlu0 %v188, 48
    %v561 = vpop.permute.xlu0 %560
    %v564 = vsel %vm207, %v559, 0
    %566 = vmatprep.subr.bf16.mxu0 0
    %567 = vmatpush1.bf16.msra.mxu0 %v561
    %568 = vmatprep.subr.bf16.mxu0 0
    %569 = vmatpush1.bf16.msra.mxu0 0
    %570 = vmatprep.subr.bf16.mxu0 0
    %571 = vmatpush1.bf16.msra.mxu0 0
    %572 = vmatprep.subr.bf16.mxu0 0
    %573 = vmatpush1.bf16.msra.mxu0 0
    %574 = vmatprep.subr.bf16.mxu0 0
    %575 = vmatpush1.bf16.msra.mxu0 0
    %576 = vmatprep.subr.bf16.mxu0 0
    %577 = vmatpush1.bf16.msra.mxu0 0
    %578 = vmatprep.subr.bf16.mxu0 0
    %579 = vmatpush1.bf16.msra.mxu0 0
    %580 = vmatprep.subr.bf16.mxu0 0
    %581 = vmatpush1.bf16.msra.mxu0 0
    %582 = vmatprep.subr.bf16.mxu0 0
    %583 = vmatpush1.bf16.msra.mxu0 0
    %584 = vmatprep.subr.bf16.mxu0 0
    %585 = vmatpush1.bf16.msra.mxu0 0
    %586 = vmatprep.subr.bf16.mxu0 0
    %587 = vmatpush1.bf16.msra.mxu0 0
    %588 = vmatprep.subr.bf16.mxu0 0
    %589 = vmatpush1.bf16.msra.mxu0 0
    %590 = vmatprep.subr.bf16.mxu0 0
    %591 = vmatpush1.bf16.msra.mxu0 0
    %592 = vmatprep.subr.bf16.mxu0 0
    %593 = vmatpush1.bf16.msra.mxu0 0
    %594 = vmatprep.subr.bf16.mxu0 0
    %595 = vmatpush1.bf16.msra.mxu0 0
    %596 = vmatprep.subr.bf16.mxu0 0
    %597 = vmatpush1.bf16.msra.mxu0 0
    %598 = vmatprep.mubr.bf16.mxu0 0
    %599 = vmatmul.mubr.bf16.gmra.mrb[0].mxu0 %v564
    %v600 = vpop.f32.mrb[0].mxu0
    %v601 = vadd.f32 0.0, %v600
    %v602 = vpop.f32.mrb[0].mxu0
    %v603 = vpop.f32.mrb[0].mxu0
    %v604 = vpop.f32.mrb[0].mxu0
    %605 = vdwg.mxu0
    %607 = vrot.lane.b32.xlu0 %v601, 16
    %v608 = vpop.permute.xlu0 %607
    %v610 = vsel %vm207, %v402, %v608
    %v611 = vpack.c.bf16 %v610, %v610
    %v613 = vsel %vm89, %v611, 0
    %615 = vmatprep.subr.bf16.mxu0 0
    %616 = vmatpush1.bf16.msra.mxu0 %v78
    %617 = vmatprep.subr.bf16.mxu0 0
    %618 = vmatpush1.bf16.msra.mxu0 %v79
    %619 = vmatprep.subr.bf16.mxu0 0
    %620 = vmatpush1.bf16.msra.mxu0 0
    %621 = vmatprep.subr.bf16.mxu0 0
    %622 = vmatpush1.bf16.msra.mxu0 0
    %623 = vmatprep.subr.bf16.mxu0 0
    %624 = vmatpush1.bf16.msra.mxu0 0
    %625 = vmatprep.subr.bf16.mxu0 0
    %626 = vmatpush1.bf16.msra.mxu0 0
    %627 = vmatprep.subr.bf16.mxu0 0
    %628 = vmatpush1.bf16.msra.mxu0 0
    %629 = vmatprep.subr.bf16.mxu0 0
    %630 = vmatpush1.bf16.msra.mxu0 0
    %631 = vmatprep.subr.bf16.mxu0 0
    %632 = vmatpush1.bf16.msra.mxu0 0
    %633 = vmatprep.subr.bf16.mxu0 0
    %634 = vmatpush1.bf16.msra.mxu0 0
    %635 = vmatprep.subr.bf16.mxu0 0
    %636 = vmatpush1.bf16.msra.mxu0 0
    %637 = vmatprep.subr.bf16.mxu0 0
    %638 = vmatpush1.bf16.msra.mxu0 0
    %639 = vmatprep.subr.bf16.mxu0 0
    %640 = vmatpush1.bf16.msra.mxu0 0
    %641 = vmatprep.subr.bf16.mxu0 0
    %642 = vmatpush1.bf16.msra.mxu0 0
    %643 = vmatprep.subr.bf16.mxu0 0
    %644 = vmatpush1.bf16.msra.mxu0 0
    %645 = vmatprep.subr.bf16.mxu0 0
    %646 = vmatpush1.bf16.msra.mxu0 0
    %647 = vmatprep.mubr.bf16.mxu0 0
    %648 = vmatmul.mubr.bf16.gmra.mrb[0].mxu0 %v613
    %v649 = vpop.f32.mrb[0].mxu0
    %v650 = vadd.f32 0.0, %v649
    %v651 = vpop.f32.mrb[0].mxu0
    %v652 = vpop.f32.mrb[0].mxu0
    %v653 = vpop.f32.mrb[0].mxu0
    %654 = vdwg.mxu0
    %v655 = vadd.f32 %v141, %v650
    %v656 = vsel %vm89, %v655, 0.0
    %657 = vadd.xlane.f32.xlu0 %v656
    %v658 = vpop.xlane.xlu0 %657
    %v659 = vrcp.pop 32.0
    %v660 = vmul.f32 %v658, %v659
    %v661 = vsub.f32 %v655, %v660
    %v662 = vmul.f32 %v661, %v661
    %v663 = vsel %vm89, %v662, 0.0
    %664 = vadd.xlane.f32.xlu0 %v663
    %v665 = vpop.xlane.xlu0 %664
    %v666 = vmul.f32 %v665, %v659
    %v667 = vadd.f32 %v666, 1e-05
    %v668 = vrsqrt.pop %v667
    %v669 = vmul.f32 %v661, %v668
    %v671 = vlaneseq
    %v672 = vshrl.u32 %v671, 7
    %v673 = vsub.s32 0, %v672
    %v674 = vrot.slane %v64, %v673
    %v676 = vmul.f32 %v669, %v674
    %v678 = vlaneseq
    %v679 = vshrl.u32 %v678, 7
    %v680 = vsub.s32 0, %v679
    %v681 = vrot.slane %v65, %v680
    %v683 = vadd.f32 %v676, %v681
    %684 = vst.msk [vmem:[%s10] sm:$0xff] %vm89, %v683
    %v685 = vld [vmem:[%s0] sm:$0xff]
    %v686 = vld [vmem:[%s1] sm:$0xff]
    %v687 = vpack.c.bf16 %v685, %v686
    %689 = vrot.lane.b32.xlu0 %v687, 96
    %v690 = vpop.permute.xlu0 %689
    %v692 = vsel %vm89, %v690, 0
    %694 = vmatprep.subr.bf16.mxu0 0
    %695 = vmatpush1.bf16.msra.mxu0 %v72
    %696 = vmatprep.subr.bf16.mxu0 0
    %697 = vmatpush1.bf16.msra.mxu0 %v73
    %698 = vmatprep.subr.bf16.mxu0 0
    %699 = vmatpush1.bf16.msra.mxu0 0
    %700 = vmatprep.subr.bf16.mxu0 0
    %701 = vmatpush1.bf16.msra.mxu0 0
    %702 = vmatprep.subr.bf16.mxu0 0
    %703 = vmatpush1.bf16.msra.mxu0 0
    %704 = vmatprep.subr.bf16.mxu0 0
    %705 = vmatpush1.bf16.msra.mxu0 0
    %706 = vmatprep.subr.bf16.mxu0 0
    %707 = vmatpush1.bf16.msra.mxu0 0
    %708 = vmatprep.subr.bf16.mxu0 0
    %709 = vmatpush1.bf16.msra.mxu0 0
    %710 = vmatprep.subr.bf16.mxu0 0
    %711 = vmatpush1.bf16.msra.mxu0 0
    %712 = vmatprep.subr.bf16.mxu0 0
    %713 = vmatpush1.bf16.msra.mxu0 0
    %714 = vmatprep.subr.bf16.mxu0 0
    %715 = vmatpush1.bf16.msra.mxu0 0
    %716 = vmatprep.subr.bf16.mxu0 0
    %717 = vmatpush1.bf16.msra.mxu0 0
    %718 = vmatprep.subr.bf16.mxu0 0
    %719 = vmatpush1.bf16.msra.mxu0 0
    %720 = vmatprep.subr.bf16.mxu0 0
    %721 = vmatpush1.bf16.msra.mxu0 0
    %722 = vmatprep.subr.bf16.mxu0 0
    %723 = vmatpush1.bf16.msra.mxu0 0
    %724 = vmatprep.subr.bf16.mxu0 0
    %725 = vmatpush1.bf16.msra.mxu0 0
    %726 = vmatprep.mubr.bf16.mxu0 0
    %727 = vmatmul.mubr.bf16.gmra.mrb[0].mxu0 %v692
    %v728 = vpop.f32.mrb[0].mxu0
    %v729 = vadd.f32 0.0, %v728
    %v730 = vpop.f32.mrb[0].mxu0
    %v731 = vpop.f32.mrb[0].mxu0
    %v732 = vadd.f32 0.0, %v731
    %v733 = vpop.f32.mrb[0].mxu0
    %734 = vdwg.mxu0
    %v735 = vpack.c.bf16 %v732, %v729
    %v736 = vadd.f32 %v732, %v193
    %v737 = vmul.f32 %v736, 0.25
    %v738 = vpack.c.bf16 %v737, %v737
    %v739 = vadd.f32 %v732, %v202
    %v740 = vmul.f32 %v739, 0.25
    %v741 = vpack.c.bf16 %v740, %v740
    %v743 = vsel %vm207, %v741, 0
    %745 = vmatprep.subr.bf16.mxu0 0
    %746 = vmatpush1.bf16.xpose.msra.mxu0 %v212
    %747 = vmatprep.subr.bf16.mxu0 0
    %748 = vmatpush1.bf16.xpose.msra.mxu0 0
    %749 = vmatprep.subr.bf16.mxu0 0
    %750 = vmatpush1.bf16.xpose.msra.mxu0 0
    %751 = vmatprep.subr.bf16.mxu0 0
    %752 = vmatpush1.bf16.xpose.msra.mxu0 0
    %753 = vmatprep.subr.bf16.mxu0 0
    %754 = vmatpush1.bf16.xpose.msra.mxu0 0
    %755 = vmatprep.subr.bf16.mxu0 0
    %756 = vmatpush1.bf16.xpose.msra.mxu0 0
    %757 = vmatprep.subr.bf16.mxu0 0
    %758 = vmatpush1.bf16.xpose.msra.mxu0 0
    %759 = vmatprep.subr.bf16.mxu0 0
    %760 = vmatpush1.bf16.xpose.msra.mxu0 0
    %761 = vmatprep.subr.bf16.mxu0 0
    %762 = vmatpush1.bf16.xpose.msra.mxu0 0
    %763 = vmatprep.subr.bf16.mxu0 0
    %764 = vmatpush1.bf16.xpose.msra.mxu0 0
    %765 = vmatprep.subr.bf16.mxu0 0
    %766 = vmatpush1.bf16.xpose.msra.mxu0 0
    %767 = vmatprep.subr.bf16.mxu0 0
    %768 = vmatpush1.bf16.xpose.msra.mxu0 0
    %769 = vmatprep.subr.bf16.mxu0 0
    %770 = vmatpush1.bf16.xpose.msra.mxu0 0
    %771 = vmatprep.subr.bf16.mxu0 0
    %772 = vmatpush1.bf16.xpose.msra.mxu0 0
    %773 = vmatprep.subr.bf16.mxu0 0
    %774 = vmatpush1.bf16.xpose.msra.mxu0 0
    %775 = vmatprep.subr.bf16.mxu0 0
    %776 = vmatpush1.bf16.xpose.msra.mxu0 0
    %777 = vmatprep.mubr.bf16.mxu0 0
    %778 = vmatmul.mubr.bf16.gmra.mrb[0].mxu0 %v743
    %v779 = vpop.f32.mrb[0].mxu0
    %v780 = vadd.f32 0.0, %v779
    %v781 = vpop.f32.mrb[0].mxu0
    %v782 = vpop.f32.mrb[0].mxu0
    %v783 = vpop.f32.mrb[0].mxu0
    %784 = vdwg.mxu0
    %v785 = vsel %vm207, %v780, 0.0
    %v786 = vsel %vm255, %v785, 0.0
    %788 = vrot.lane.b32.xlu0 %v786, 127
    %v789 = vpop.permute.xlu0 %788
    %v791 = vsel %vm257, %v785, %v789
    %793 = vrot.lane.b32.xlu0 %v791, 127
    %v794 = vpop.permute.xlu0 %793
    %v796 = vsel %vm263, %v785, %v794
    %798 = vrot.lane.b32.xlu0 %v796, 127
    %v799 = vpop.permute.xlu0 %798
    %v801 = vsel %vm269, %v785, %v799
    %803 = vrot.lane.b32.xlu0 %v801, 127
    %v804 = vpop.permute.xlu0 %803
    %v806 = vsel %vm275, %v785, %v804
    %808 = vrot.lane.b32.xlu0 %v806, 127
    %v809 = vpop.permute.xlu0 %808
    %v811 = vsel %vm281, %v785, %v809
    %813 = vrot.lane.b32.xlu0 %v811, 127
    %v814 = vpop.permute.xlu0 %813
    %v816 = vsel %vm287, %v785, %v814
    %818 = vrot.lane.b32.xlu0 %v816, 127
    %v819 = vpop.permute.xlu0 %818
    %v821 = vsel %vm293, %v785, %v819
    %823 = vrot.lane.b32.xlu0 %v735, 96
    %v824 = vpop.permute.xlu0 %823
    %v826 = vsel %vm207, %v738, 0
    %v829 = vsel %vm207, %v824, 0
    %831 = vmatprep.subr.bf16.mxu0 0
    %832 = vmatpush1.bf16.xpose.msra.mxu0 %v829
    %833 = vmatprep.subr.bf16.mxu0 0
    %834 = vmatpush1.bf16.xpose.msra.mxu0 0
    %835 = vmatprep.subr.bf16.mxu0 0
    %836 = vmatpush1.bf16.xpose.msra.mxu0 0
    %837 = vmatprep.subr.bf16.mxu0 0
    %838 = vmatpush1.bf16.xpose.msra.mxu0 0
    %839 = vmatprep.subr.bf16.mxu0 0
    %840 = vmatpush1.bf16.xpose.msra.mxu0 0
    %841 = vmatprep.subr.bf16.mxu0 0
    %842 = vmatpush1.bf16.xpose.msra.mxu0 0
    %843 = vmatprep.subr.bf16.mxu0 0
    %844 = vmatpush1.bf16.xpose.msra.mxu0 0
    %845 = vmatprep.subr.bf16.mxu0 0
    %846 = vmatpush1.bf16.xpose.msra.mxu0 0
    %847 = vmatprep.subr.bf16.mxu0 0
    %848 = vmatpush1.bf16.xpose.msra.mxu0 0
    %849 = vmatprep.subr.bf16.mxu0 0
    %850 = vmatpush1.bf16.xpose.msra.mxu0 0
    %851 = vmatprep.subr.bf16.mxu0 0
    %852 = vmatpush1.bf16.xpose.msra.mxu0 0
    %853 = vmatprep.subr.bf16.mxu0 0
    %854 = vmatpush1.bf16.xpose.msra.mxu0 0
    %855 = vmatprep.subr.bf16.mxu0 0
    %856 = vmatpush1.bf16.xpose.msra.mxu0 0
    %857 = vmatprep.subr.bf16.mxu0 0
    %858 = vmatpush1.bf16.xpose.msra.mxu0 0
    %859 = vmatprep.subr.bf16.mxu0 0
    %860 = vmatpush1.bf16.xpose.msra.mxu0 0
    %861 = vmatprep.subr.bf16.mxu0 0
    %862 = vmatpush1.bf16.xpose.msra.mxu0 0
    %863 = vmatprep.mubr.bf16.mxu0 0
    %864 = vmatmul.mubr.bf16.gmra.mrb[0].mxu0 %v826
    %v865 = vpop.f32.mrb[0].mxu0
    %v866 = vadd.f32 %v821, %v865
    %v867 = vpop.f32.mrb[0].mxu0
    %v868 = vpop.f32.mrb[0].mxu0
    %v869 = vpop.f32.mrb[0].mxu0
    %870 = vdwg.mxu0
    %v871 = vsel %vm140, -1e+30, %v866
    %v872 = vsel %vm207, %v871, -inf
    %873 = vmax.xlane.f32.xlu0 %v872
    %v874 = vpop.xlane.xlu0 %873
    %v875 = vsub.f32 %v871, %v874
    %v876 = vmul.f32 %v875, 1.442695
    %v877 = vpow.pop %v876
    %v878 = vsel %vm207, %v877, 0.0
    %879 = vadd.xlane.f32.xlu0 %v878
    %v880 = vpop.xlane.xlu0 %879
    %v881 = vrcp.pop %v880
    %v882 = vmul.f32 %v877, %v881
    %v883 = vpack.c.bf16 %v882, %v882
    %884 = vrot.lane.b32.xlu0 %v735, 64
    %v885 = vpop.permute.xlu0 %884
    %v888 = vsel %vm207, %v883, 0
    %890 = vmatprep.subr.bf16.mxu0 0
    %891 = vmatpush1.bf16.msra.mxu0 %v885
    %892 = vmatprep.subr.bf16.mxu0 0
    %893 = vmatpush1.bf16.msra.mxu0 0
    %894 = vmatprep.subr.bf16.mxu0 0
    %895 = vmatpush1.bf16.msra.mxu0 0
    %896 = vmatprep.subr.bf16.mxu0 0
    %897 = vmatpush1.bf16.msra.mxu0 0
    %898 = vmatprep.subr.bf16.mxu0 0
    %899 = vmatpush1.bf16.msra.mxu0 0
    %900 = vmatprep.subr.bf16.mxu0 0
    %901 = vmatpush1.bf16.msra.mxu0 0
    %902 = vmatprep.subr.bf16.mxu0 0
    %903 = vmatpush1.bf16.msra.mxu0 0
    %904 = vmatprep.subr.bf16.mxu0 0
    %905 = vmatpush1.bf16.msra.mxu0 0
    %906 = vmatprep.subr.bf16.mxu0 0
    %907 = vmatpush1.bf16.msra.mxu0 0
    %908 = vmatprep.subr.bf16.mxu0 0
    %909 = vmatpush1.bf16.msra.mxu0 0
    %910 = vmatprep.subr.bf16.mxu0 0
    %911 = vmatpush1.bf16.msra.mxu0 0
    %912 = vmatprep.subr.bf16.mxu0 0
    %913 = vmatpush1.bf16.msra.mxu0 0
    %914 = vmatprep.subr.bf16.mxu0 0
    %915 = vmatpush1.bf16.msra.mxu0 0
    %916 = vmatprep.subr.bf16.mxu0 0
    %917 = vmatpush1.bf16.msra.mxu0 0
    %918 = vmatprep.subr.bf16.mxu0 0
    %919 = vmatpush1.bf16.msra.mxu0 0
    %920 = vmatprep.subr.bf16.mxu0 0
    %921 = vmatpush1.bf16.msra.mxu0 0
    %922 = vmatprep.mubr.bf16.mxu0 0
    %923 = vmatmul.mubr.bf16.gmra.mrb[0].mxu0 %v888
    %v924 = vpop.f32.mrb[0].mxu0
    %v925 = vadd.f32 0.0, %v924
    %v926 = vpop.f32.mrb[0].mxu0
    %v927 = vpop.f32.mrb[0].mxu0
    %v928 = vpop.f32.mrb[0].mxu0
    %929 = vdwg.mxu0
    %931 = vrot.lane.b32.xlu0 %v741, 112
    %v932 = vpop.permute.xlu0 %931
    %v934 = vsel %vm207, %v932, 0
    %936 = vmatprep.subr.bf16.mxu0 0
    %937 = vmatpush1.bf16.xpose.msra.mxu0 %v417
    %938 = vmatprep.subr.bf16.mxu0 0
    %939 = vmatpush1.bf16.xpose.msra.mxu0 0
    %940 = vmatprep.subr.bf16.mxu0 0
    %941 = vmatpush1.bf16.xpose.msra.mxu0 0
    %942 = vmatprep.subr.bf16.mxu0 0
    %943 = vmatpush1.bf16.xpose.msra.mxu0 0
    %944 = vmatprep.subr.bf16.mxu0 0
    %945 = vmatpush1.bf16.xpose.msra.mxu0 0
    %946 = vmatprep.subr.bf16.mxu0 0
    %947 = vmatpush1.bf16.xpose.msra.mxu0 0
    %948 = vmatprep.subr.bf16.mxu0 0
    %949 = vmatpush1.bf16.xpose.msra.mxu0 0
    %950 = vmatprep.subr.bf16.mxu0 0
    %951 = vmatpush1.bf16.xpose.msra.mxu0 0
    %952 = vmatprep.subr.bf16.mxu0 0
    %953 = vmatpush1.bf16.xpose.msra.mxu0 0
    %954 = vmatprep.subr.bf16.mxu0 0
    %955 = vmatpush1.bf16.xpose.msra.mxu0 0
    %956 = vmatprep.subr.bf16.mxu0 0
    %957 = vmatpush1.bf16.xpose.msra.mxu0 0
    %958 = vmatprep.subr.bf16.mxu0 0
    %959 = vmatpush1.bf16.xpose.msra.mxu0 0
    %960 = vmatprep.subr.bf16.mxu0 0
    %961 = vmatpush1.bf16.xpose.msra.mxu0 0
    %962 = vmatprep.subr.bf16.mxu0 0
    %963 = vmatpush1.bf16.xpose.msra.mxu0 0
    %964 = vmatprep.subr.bf16.mxu0 0
    %965 = vmatpush1.bf16.xpose.msra.mxu0 0
    %966 = vmatprep.subr.bf16.mxu0 0
    %967 = vmatpush1.bf16.xpose.msra.mxu0 0
    %968 = vmatprep.mubr.bf16.mxu0 0
    %969 = vmatmul.mubr.bf16.gmra.mrb[0].mxu0 %v934
    %v970 = vpop.f32.mrb[0].mxu0
    %v971 = vadd.f32 0.0, %v970
    %v972 = vpop.f32.mrb[0].mxu0
    %v973 = vpop.f32.mrb[0].mxu0
    %v974 = vpop.f32.mrb[0].mxu0
    %975 = vdwg.mxu0
    %v976 = vsel %vm207, %v971, 0.0
    %v977 = vsel %vm255, %v976, 0.0
    %979 = vrot.lane.b32.xlu0 %v977, 127
    %v980 = vpop.permute.xlu0 %979
    %v982 = vsel %vm257, %v976, %v980
    %984 = vrot.lane.b32.xlu0 %v982, 127
    %v985 = vpop.permute.xlu0 %984
    %v987 = vsel %vm263, %v976, %v985
    %989 = vrot.lane.b32.xlu0 %v987, 127
    %v990 = vpop.permute.xlu0 %989
    %v992 = vsel %vm269, %v976, %v990
    %994 = vrot.lane.b32.xlu0 %v992, 127
    %v995 = vpop.permute.xlu0 %994
    %v997 = vsel %vm275, %v976, %v995
    %999 = vrot.lane.b32.xlu0 %v997, 127
    %v1000 = vpop.permute.xlu0 %999
    %v1002 = vsel %vm281, %v976, %v1000
    %1004 = vrot.lane.b32.xlu0 %v1002, 127
    %v1005 = vpop.permute.xlu0 %1004
    %v1007 = vsel %vm287, %v976, %v1005
    %1009 = vrot.lane.b32.xlu0 %v1007, 127
    %v1010 = vpop.permute.xlu0 %1009
    %v1012 = vsel %vm293, %v976, %v1010
    %1014 = vrot.lane.b32.xlu0 %v738, 112
    %v1015 = vpop.permute.xlu0 %1014
    %1016 = vrot.lane.b32.xlu0 %v735, 80
    %v1017 = vpop.permute.xlu0 %1016
    %v1019 = vsel %vm207, %v1015, 0
    %v1022 = vsel %vm207, %v1017, 0
    %1024 = vmatprep.subr.bf16.mxu0 0
    %1025 = vmatpush1.bf16.xpose.msra.mxu0 %v1022
    %1026 = vmatprep.subr.bf16.mxu0 0
    %1027 = vmatpush1.bf16.xpose.msra.mxu0 0
    %1028 = vmatprep.subr.bf16.mxu0 0
    %1029 = vmatpush1.bf16.xpose.msra.mxu0 0
    %1030 = vmatprep.subr.bf16.mxu0 0
    %1031 = vmatpush1.bf16.xpose.msra.mxu0 0
    %1032 = vmatprep.subr.bf16.mxu0 0
    %1033 = vmatpush1.bf16.xpose.msra.mxu0 0
    %1034 = vmatprep.subr.bf16.mxu0 0
    %1035 = vmatpush1.bf16.xpose.msra.mxu0 0
    %1036 = vmatprep.subr.bf16.mxu0 0
    %1037 = vmatpush1.bf16.xpose.msra.mxu0 0
    %1038 = vmatprep.subr.bf16.mxu0 0
    %1039 = vmatpush1.bf16.xpose.msra.mxu0 0
    %1040 = vmatprep.subr.bf16.mxu0 0
    %1041 = vmatpush1.bf16.xpose.msra.mxu0 0
    %1042 = vmatprep.subr.bf16.mxu0 0
    %1043 = vmatpush1.bf16.xpose.msra.mxu0 0
    %1044 = vmatprep.subr.bf16.mxu0 0
    %1045 = vmatpush1.bf16.xpose.msra.mxu0 0
    %1046 = vmatprep.subr.bf16.mxu0 0
    %1047 = vmatpush1.bf16.xpose.msra.mxu0 0
    %1048 = vmatprep.subr.bf16.mxu0 0
    %1049 = vmatpush1.bf16.xpose.msra.mxu0 0
    %1050 = vmatprep.subr.bf16.mxu0 0
    %1051 = vmatpush1.bf16.xpose.msra.mxu0 0
    %1052 = vmatprep.subr.bf16.mxu0 0
    %1053 = vmatpush1.bf16.xpose.msra.mxu0 0
    %1054 = vmatprep.subr.bf16.mxu0 0
    %1055 = vmatpush1.bf16.xpose.msra.mxu0 0
    %1056 = vmatprep.mubr.bf16.mxu0 0
    %1057 = vmatmul.mubr.bf16.gmra.mrb[0].mxu0 %v1019
    %v1058 = vpop.f32.mrb[0].mxu0
    %v1059 = vadd.f32 %v1012, %v1058
    %v1060 = vpop.f32.mrb[0].mxu0
    %v1061 = vpop.f32.mrb[0].mxu0
    %v1062 = vpop.f32.mrb[0].mxu0
    %1063 = vdwg.mxu0
    %v1064 = vsel %vm140, -1e+30, %v1059
    %v1065 = vsel %vm207, %v1064, -inf
    %1066 = vmax.xlane.f32.xlu0 %v1065
    %v1067 = vpop.xlane.xlu0 %1066
    %v1068 = vsub.f32 %v1064, %v1067
    %v1069 = vmul.f32 %v1068, 1.442695
    %v1070 = vpow.pop %v1069
    %v1071 = vsel %vm207, %v1070, 0.0
    %1072 = vadd.xlane.f32.xlu0 %v1071
    %v1073 = vpop.xlane.xlu0 %1072
    %v1074 = vrcp.pop %v1073
    %v1075 = vmul.f32 %v1070, %v1074
    %v1076 = vpack.c.bf16 %v1075, %v1075
    %1077 = vrot.lane.b32.xlu0 %v735, 48
    %v1078 = vpop.permute.xlu0 %1077
    %v1081 = vsel %vm207, %v1076, 0
    %1083 = vmatprep.subr.bf16.mxu0 0
    %1084 = vmatpush1.bf16.msra.mxu0 %v1078
    %1085 = vmatprep.subr.bf16.mxu0 0
    %1086 = vmatpush1.bf16.msra.mxu0 0
    %1087 = vmatprep.subr.bf16.mxu0 0
    %1088 = vmatpush1.bf16.msra.mxu0 0
    %1089 = vmatprep.subr.bf16.mxu0 0
    %1090 = vmatpush1.bf16.msra.mxu0 0
    %1091 = vmatprep.subr.bf16.mxu0 0
    %1092 = vmatpush1.bf16.msra.mxu0 0
    %1093 = vmatprep.subr.bf16.mxu0 0
    %1094 = vmatpush1.bf16.msra.mxu0 0
    %1095 = vmatprep.subr.bf16.mxu0 0
    %1096 = vmatpush1.bf16.msra.mxu0 0
    %1097 = vmatprep.subr.bf16.mxu0 0
    %1098 = vmatpush1.bf16.msra.mxu0 0
    %1099 = vmatprep.subr.bf16.mxu0 0
    %1100 = vmatpush1.bf16.msra.mxu0 0
    %1101 = vmatprep.subr.bf16.mxu0 0
    %1102 = vmatpush1.bf16.msra.mxu0 0
    %1103 = vmatprep.subr.bf16.mxu0 0
    %1104 = vmatpush1.bf16.msra.mxu0 0
    %1105 = vmatprep.subr.bf16.mxu0 0
    %1106 = vmatpush1.bf16.msra.mxu0 0
    %1107 = vmatprep.subr.bf16.mxu0 0
    %1108 = vmatpush1.bf16.msra.mxu0 0
    %1109 = vmatprep.subr.bf16.mxu0 0
    %1110 = vmatpush1.bf16.msra.mxu0 0
    %1111 = vmatprep.subr.bf16.mxu0 0
    %1112 = vmatpush1.bf16.msra.mxu0 0
    %1113 = vmatprep.subr.bf16.mxu0 0
    %1114 = vmatpush1.bf16.msra.mxu0 0
    %1115 = vmatprep.mubr.bf16.mxu0 0
    %1116 = vmatmul.mubr.bf16.gmra.mrb[0].mxu0 %v1081
    %v1117 = vpop.f32.mrb[0].mxu0
    %v1118 = vadd.f32 0.0, %v1117
    %v1119 = vpop.f32.mrb[0].mxu0
    %v1120 = vpop.f32.mrb[0].mxu0
    %v1121 = vpop.f32.mrb[0].mxu0
    %1122 = vdwg.mxu0
    %1124 = vrot.lane.b32.xlu0 %v1118, 16
    %v1125 = vpop.permute.xlu0 %1124
    %v1127 = vsel %vm207, %v925, %v1125
    %v1128 = vpack.c.bf16 %v1127, %v1127
    %v1130 = vsel %vm89, %v1128, 0
    %1132 = vmatprep.subr.bf16.mxu0 0
    %1133 = vmatpush1.bf16.msra.mxu0 %v78
    %1134 = vmatprep.subr.bf16.mxu0 0
    %1135 = vmatpush1.bf16.msra.mxu0 %v79
    %1136 = vmatprep.subr.bf16.mxu0 0
    %1137 = vmatpush1.bf16.msra.mxu0 0
    %1138 = vmatprep.subr.bf16.mxu0 0
    %1139 = vmatpush1.bf16.msra.mxu0 0
    %1140 = vmatprep.subr.bf16.mxu0 0
    %1141 = vmatpush1.bf16.msra.mxu0 0
    %1142 = vmatprep.subr.bf16.mxu0 0
    %1143 = vmatpush1.bf16.msra.mxu0 0
    %1144 = vmatprep.subr.bf16.mxu0 0
    %1145 = vmatpush1.bf16.msra.mxu0 0
    %1146 = vmatprep.subr.bf16.mxu0 0
    %1147 = vmatpush1.bf16.msra.mxu0 0
    %1148 = vmatprep.subr.bf16.mxu0 0
    %1149 = vmatpush1.bf16.msra.mxu0 0
    %1150 = vmatprep.subr.bf16.mxu0 0
    %1151 = vmatpush1.bf16.msra.mxu0 0
    %1152 = vmatprep.subr.bf16.mxu0 0
    %1153 = vmatpush1.bf16.msra.mxu0 0
    %1154 = vmatprep.subr.bf16.mxu0 0
    %1155 = vmatpush1.bf16.msra.mxu0 0
    %1156 = vmatprep.subr.bf16.mxu0 0
    %1157 = vmatpush1.bf16.msra.mxu0 0
    %1158 = vmatprep.subr.bf16.mxu0 0
    %1159 = vmatpush1.bf16.msra.mxu0 0
    %1160 = vmatprep.subr.bf16.mxu0 0
    %1161 = vmatpush1.bf16.msra.mxu0 0
    %1162 = vmatprep.subr.bf16.mxu0 0
    %1163 = vmatpush1.bf16.msra.mxu0 0
    %1164 = vmatprep.mubr.bf16.mxu0 0
    %1165 = vmatmul.mubr.bf16.gmra.mrb[0].mxu0 %v1130
    %v1166 = vpop.f32.mrb[0].mxu0
    %v1167 = vadd.f32 0.0, %v1166
    %v1168 = vpop.f32.mrb[0].mxu0
    %v1169 = vpop.f32.mrb[0].mxu0
    %v1170 = vpop.f32.mrb[0].mxu0
    %1171 = vdwg.mxu0
    %1173 = vrot.lane.b32.xlu0 %v1167, 32
    %v1174 = vpop.permute.xlu0 %1173
    %v1176 = vadd.f32 %v685, %v1174
    %1178 = vrot.lane.b32.xlu0 %v1176, 96
    %v1179 = vpop.permute.xlu0 %1178
    %v1181 = vsel %vm89, %v1179, 0.0
    %1182 = vadd.xlane.f32.xlu0 %v1181
    %v1183 = vpop.xlane.xlu0 %1182
    %v1184 = vmul.f32 %v1183, %v659
    %v1185 = vsub.f32 %v1176, %v1184
    %v1186 = vmul.f32 %v1185, %v1185
    %1188 = vrot.lane.b32.xlu0 %v1186, 96
    %v1189 = vpop.permute.xlu0 %1188
    %v1191 = vsel %vm89, %v1189, 0.0
    %1192 = vadd.xlane.f32.xlu0 %v1191
    %v1193 = vpop.xlane.xlu0 %1192
    %v1194 = vmul.f32 %v1193, %v659
    %v1195 = vadd.f32 %v1194, 1e-05
    %v1196 = vrsqrt.pop %v1195
    %v1197 = vmul.f32 %v1185, %v1196
    %1198 = vrot.lane.b32.xlu0 %v674, 32
    %v1199 = vpop.permute.xlu0 %1198
    %v1201 = vmul.f32 %v1197, %v1199
    %1202 = vrot.lane.b32.xlu0 %v681, 32
    %v1203 = vpop.permute.xlu0 %1202
    %v1205 = vadd.f32 %v1201, %v1203
    %vm1206 = vcmask 523520
    %1207 = vst.msk [vmem:[%s10] sm:$0xff] %vm1206, %v1205
    // Predicated region
    $region50: #{rel_multi_head_attn_forward.1} parent=1 // pred_check
      _
    $region51: #{rel_multi_head_attn_forward.1} parent=1 // pred_check_branch
      %1209 = sbr.rel (0) target = $region53
    $region52: #{rel_multi_head_attn_forward.1} parent=1 // pred_region
      _
    $region53: #{rel_multi_head_attn_forward.1} parent=1 // pred_fallthru
      _
    // Predicated region
    $region54: #{rel_multi_head_attn_forward.1} parent=1 // pred_check
      _
    $region55: #{rel_multi_head_attn_forward.1} parent=1 // pred_check_branch
      %1211 = sbr.rel (0) target = $region57
    $region56: #{rel_multi_head_attn_forward.1} parent=1 // pred_region
      _
    $region57: #{rel_multi_head_attn_forward.1} parent=1 // pred_fallthru
      _
    %1212 = vsyncpa [#allocation3], 1
    %1213 = vsyncpa [#allocation5], 1

</llo_original>
